<compile_context>
chip_gen: v7x
topology: tpu7x:2x2x1
jax: 0.10.0
libtpu: 0.0.40
codegen_flags: <defaults>
</compile_context>

<pallas_src>
import functools

import jax
import jax.numpy as jnp
from jax import lax
from jax.experimental import pallas as pl
from jax.experimental.pallas import tpu as pltpu


# --------------------------------------------------------------------------
# generation-aware defaults & small helpers
# --------------------------------------------------------------------------
def _hw_defaults():
    vmem_cap = 128 * 1024 * 1024
    try:
        vmem_cap = int(pltpu.get_tpu_info().vmem_capacity_bytes)
    except Exception:
        pass
    if vmem_cap <= 64 * 1024 * 1024:        # v7x-class: 64 MiB per TensorCore
        return {"vmem_limit": 34 * 1024 * 1024, "row_tile": 128,
                "mm_tm": 128, "mm_tn": 256, "mm_tk": 512}
    return {"vmem_limit": 48 * 1024 * 1024, "row_tile": 256,
            "mm_tm": 256, "mm_tn": 256, "mm_tk": 512}


def _pick_tile(dim, target, align):
    """Largest `align`-multiple tile <= target dividing `dim`, else full dim."""
    if dim <= target:
        return dim
    t = (target // align) * align
    while t >= align:
        if dim % t == 0:
            return t
        t -= align
    return dim


def _mxu_dot(a, b, use_bf16):
    if use_bf16:
        a = a.astype(jnp.bfloat16)
        b = b.astype(jnp.bfloat16)
    return jnp.dot(a, b, preferred_element_type=jnp.float32)


def _mxu_dot_nt(a, b, use_bf16):
    # (M, D) x (N, D) -> (M, N): contract last dims (MXU-friendly q@k.T form).
    if use_bf16:
        a = a.astype(jnp.bfloat16)
        b = b.astype(jnp.bfloat16)
    return lax.dot_general(a, b, (((1,), (1,)), ((), ())),
                           preferred_element_type=jnp.float32)


# --------------------------------------------------------------------------
# tiled projection matmul (fp32 VMEM accumulator over the K grid axis)
# --------------------------------------------------------------------------
def _matmul_kernel(x_ref, w_ref, o_ref, acc_ref, *, use_bf16):
    @pl.when(pl.program_id(2) == 0)
    def _init():
        acc_ref[...] = jnp.zeros_like(acc_ref)

    acc_ref[...] += _mxu_dot(x_ref[...], w_ref[...], use_bf16)

    @pl.when(pl.program_id(2) == pl.num_programs(2) - 1)
    def _flush():
        o_ref[...] = acc_ref[...].astype(o_ref.dtype)


def pallas_matmul(x, w, *, out_dtype, use_bf16, hw):
    M, Kd = x.shape
    _, N = w.shape
    tm = _pick_tile(M, hw["mm_tm"], 8)
    tn = _pick_tile(N, hw["mm_tn"], 128)
    tk = _pick_tile(Kd, hw["mm_tk"], 128)
    return pl.pallas_call(
        functools.partial(_matmul_kernel, use_bf16=use_bf16),
        grid=(M // tm, N // tn, Kd // tk),
        in_specs=[pl.BlockSpec((tm, tk), lambda i, j, k: (i, k)),
                  pl.BlockSpec((tk, tn), lambda i, j, k: (k, j))],
        out_specs=pl.BlockSpec((tm, tn), lambda i, j, k: (i, j)),
        out_shape=jax.ShapeDtypeStruct((M, N), out_dtype),
        scratch_shapes=[pltpu.VMEM((tm, tn), jnp.float32)],
        compiler_params=pltpu.CompilerParams(
            dimension_semantics=("parallel", "parallel", "arbitrary"),
            vmem_limit_bytes=hw["vmem_limit"]),
    )(x, w)


# --------------------------------------------------------------------------
# row-tiled LayerNorm (pre_lnorm path only)
# --------------------------------------------------------------------------
def _layernorm_kernel(x_ref, g_ref, b_ref, o_ref, *, eps):
    x = x_ref[...]
    mu = jnp.mean(x, axis=-1, keepdims=True)
    var = jnp.mean((x - mu) * (x - mu), axis=-1, keepdims=True)
    o_ref[...] = ((x - mu) * lax.rsqrt(var + eps) * g_ref[...]
                  + b_ref[...]).astype(o_ref.dtype)


def pallas_layernorm(x, g, b, *, hw, eps=1e-5):
    M, E = x.shape
    tm = _pick_tile(M, hw["row_tile"], 8)
    return pl.pallas_call(
        functools.partial(_layernorm_kernel, eps=eps),
        grid=(M // tm,),
        in_specs=[pl.BlockSpec((tm, E), lambda i: (i, 0)),
                  pl.BlockSpec((1, E), lambda i: (0, 0)),
                  pl.BlockSpec((1, E), lambda i: (0, 0))],
        out_specs=pl.BlockSpec((tm, E), lambda i: (i, 0)),
        out_shape=jax.ShapeDtypeStruct((M, E), jnp.float32),
        compiler_params=pltpu.CompilerParams(
            dimension_semantics=("parallel",),
            vmem_limit_bytes=hw["vmem_limit"]),
    )(x, g, b)


# --------------------------------------------------------------------------
# fused attention kernel: AC + in-VMEM rel-shifted BD + softmax + P@V
# --------------------------------------------------------------------------
def _rel_shift_in_vmem(x_all, row_start, nrows_out):
    """Exact Transformer-XL _rel_shift of the BD block, entirely in VMEM.

    x_all: (nrows, R) unshifted BD values for global query rows
    [row_start, row_start + nrows).  When nrows == nrows_out + 1 the last row
    is the first query row of the *next* q-tile (the shift mixes adjacent
    rows).  Returns the (nrows_out, R) rel-shifted block.

    Shifted row g is:  cols <= g     -> x[g,   col - g - 1 + R]
                       col == g + 1  -> 0
                       cols >= g + 2 -> x[g+1, col - g - 2]
    i.e. a circular lane shift of row g by (g + 1) mod R, plus the same for
    row g+1.  The per-row shift is built from log2(R) uniform power-of-two
    shifts (static slice + concat, unambiguous semantics) selected per row.
    TODO(synk): replace with a single pltpu.roll(x, row_start+1, 1, stride=1,
    stride_axis=0) (XLU) once its strided semantics are validated on-target.
    """
    nrows, R = x_all.shape
    shift_amt = (row_start + 1
                 + lax.broadcasted_iota(jnp.int32, (nrows, 1), 0)) % R
    a = x_all
    for bit in range((R - 1).bit_length()):
        step = 1 << bit
        rolled = jnp.concatenate([a[:, R - step:], a[:, :R - step]], axis=1)
        take = ((shift_amt // step) % 2) == 1
        a = jnp.where(take, rolled, a)

    if nrows == nrows_out:           # whole-Q tile: row g+1 always in-tile
        a_lo = a
        a_hi = jnp.concatenate([a[1:, :], jnp.zeros_like(a[:1, :])], axis=0)
    else:                            # last row comes from the next q-tile
        a_lo = a[:nrows_out, :]
        a_hi = a[1:nrows_out + 1, :]

    row_g = row_start + lax.broadcasted_iota(jnp.int32, (nrows_out, R), 0)
    col = lax.broadcasted_iota(jnp.int32, (nrows_out, R), 1)
    return jnp.where(col <= row_g, a_lo,
                     jnp.where(col == row_g + 1, 0.0, a_hi))


def _attn_kernel(qr_ref, kr_ref, vr_ref, qp_ref, kp_ref, vp_ref,
                 rk_ref, rwb_ref, rrb_ref, or_ref, op_ref,
                 *, tq, nq, scale, use_bf16, approx_recip):
    h = pl.program_id(1)
    Q = kr_ref.shape[1]              # klen (== qlen, no mems)
    R = rk_ref.shape[0]              # rlen (== klen, asserted in the wrapper)
    f32 = jnp.float32

    if nq == 1:
        row_start = 0
        q_r = qr_ref[0]
        q_p = qp_ref[0]
    else:
        row_start = pl.multiple_of(pl.program_id(2) * tq, tq)
        q_r = qr_ref[0, pl.ds(row_start, tq), :]
        q_p = qp_ref[0, pl.ds(row_start, tq), :]

    b_w = rwb_ref[pl.ds(h, 1), :]    # (1, D)
    b_r = rrb_ref[pl.ds(h, 1), :]

    # fold the softmax scale into the biased queries (sqrt is 1-homogeneous)
    rw_r = (q_r.astype(f32) + b_w) * scale
    rw_p = (q_p.astype(f32) + b_w) * scale
    rr_r = (q_r.astype(f32) + b_r) * scale
    rr_p = (q_p.astype(f32) + b_r) * scale

    k_r = kr_ref[0]
    k_p = kp_ref[0]
    rk = rk_ref[...]

    # AC term.  NOTE: the reference uses the *real* query in both AC_phase
    # terms, so the duplicated matmul collapses to a VPU scale by 2.
    ac_r = _mxu_dot_nt(rw_r, k_r, use_bf16) - _mxu_dot_nt(rw_p, k_p, use_bf16)
    ac_p = 2.0 * _mxu_dot_nt(rw_r, k_p, use_bf16)
    ac = jnp.sqrt(ac_r * ac_r + ac_p * ac_p)                # (tq, K)

    # BD term: magnitude commutes with the entry-permuting / zero-inserting
    # rel_shift, so only the single magnitude matrix needs shifting.
    bd_r = _mxu_dot_nt(rr_r, rk, use_bf16)
    bd_p = _mxu_dot_nt(rr_p, rk, use_bf16)
    x = jnp.sqrt(bd_r * bd_r + bd_p * bd_p)                 # (tq, R)

    if nq == 1:
        x_all = x
    else:
        # rel_shift of the last tile row needs the first query row of the next
        # tile (clamped for the final tile, where it is masked out anyway).
        ex = jnp.minimum(row_start + tq, Q - 1)
        qx_r = qr_ref[0, pl.ds(ex, 1), :]
        qx_p = qp_ref[0, pl.ds(ex, 1), :]
        rx_r = (qx_r.astype(f32) + b_r) * scale
        rx_p = (qx_p.astype(f32) + b_r) * scale
        bx_r = _mxu_dot_nt(rx_r, rk, use_bf16)
        bx_p = _mxu_dot_nt(rx_p, rk, use_bf16)
        x_ex = jnp.sqrt(bx_r * bx_r + bx_p * bx_p)          # (1, R)
        x_all = jnp.concatenate([x, x_ex], axis=0)

    bd = _rel_shift_in_vmem(x_all, row_start, tq)           # (tq, R)

    # softmax over klen (f32 elementwise; EUP reciprocal optional)
    score = ac + bd
    m = jnp.max(score, axis=-1, keepdims=True)
    e = jnp.exp(score - m)
    s = jnp.sum(e, axis=-1, keepdims=True)
    if approx_recip:
        p = e * pl.reciprocal(s, approx=True)
    else:
        p = e / s

    v_r = vr_ref[0]
    v_p = vp_ref[0]
    pv = p.astype(v_r.dtype) if use_bf16 else p
    or_ref[0] = _mxu_dot(pv, v_r, use_bf16).astype(or_ref.dtype)
    op_ref[0] = _mxu_dot(pv, v_p, use_bf16).astype(op_ref.dtype)


# --------------------------------------------------------------------------
# output projection fused with residual-add + LayerNorm (K-tiled over H*D)
# --------------------------------------------------------------------------
def _out_proj_ln_kernel(av_ref, w_ref, res_ref, g_ref, b_ref, o_ref, acc_ref,
                        *, eps, skip_ln, use_bf16):
    @pl.when(pl.program_id(1) == 0)
    def _init():
        acc_ref[...] = jnp.zeros_like(acc_ref)

    acc_ref[...] += _mxu_dot(av_ref[...], w_ref[...], use_bf16)

    @pl.when(pl.program_id(1) == pl.num_programs(1) - 1)
    def _epilogue():
        y = acc_ref[...]
        if skip_ln:        # pre_lnorm: reference returns attn_out directly
            o_ref[...] = y.astype(o_ref.dtype)
        else:
            xr = res_ref[...] + y
            mu = jnp.mean(xr, axis=-1, keepdims=True)
            var = jnp.mean((xr - mu) * (xr - mu), axis=-1, keepdims=True)
            o_ref[...] = ((xr - mu) * lax.rsqrt(var + eps) * g_ref[...]
                          + b_ref[...]).astype(o_ref.dtype)


def pallas_out_proj_ln(av, w, resid, g, b, *, pre_lnorm, use_bf16, hw, eps=1e-5):
    M, HD = av.shape
    E = w.shape[1]
    tm = _pick_tile(M, hw["row_tile"], 8)
    tk = _pick_tile(HD, hw["mm_tk"], 128)
    # E is intentionally not tiled: the fused LayerNorm needs the full row.
    return pl.pallas_call(
        functools.partial(_out_proj_ln_kernel, eps=eps, skip_ln=pre_lnorm,
                          use_bf16=use_bf16),
        grid=(M // tm, HD // tk),
        in_specs=[pl.BlockSpec((tm, tk), lambda i, k: (i, k)),
                  pl.BlockSpec((tk, E), lambda i, k: (k, 0)),
                  pl.BlockSpec((tm, E), lambda i, k: (i, 0)),
                  pl.BlockSpec((1, E), lambda i, k: (0, 0)),
                  pl.BlockSpec((1, E), lambda i, k: (0, 0))],
        out_specs=pl.BlockSpec((tm, E), lambda i, k: (i, 0)),
        out_shape=jax.ShapeDtypeStruct((M, E), jnp.float32),
        scratch_shapes=[pltpu.VMEM((tm, E), jnp.float32)],
        compiler_params=pltpu.CompilerParams(
            dimension_semantics=("parallel", "arbitrary"),
            vmem_limit_bytes=hw["vmem_limit"]),
    )(av, w, resid, g, b)


# --------------------------------------------------------------------------
# Module
# --------------------------------------------------------------------------
class RelPartialLearnableMultiHeadAttnPallas:
    def __init__(self, n_head, n_embed, d_head, dropout=0.0, dropatt=0.0,
                 pre_lnorm=False, mxu_bf16=True, approx_recip=True, key=None):
        self.n_head = n_head
        self.n_embed = n_embed
        self.d_head = d_head
        self.scale = 1.0 / d_head ** 0.5
        self.pre_lnorm = pre_lnorm
        self.mxu_bf16 = mxu_bf16          # bf16 MXU operands, f32 accumulation
        self.approx_recip = approx_recip  # EUP reciprocal in the softmax denom
        self._hw = _hw_defaults()
        # dropout / dropatt are identity here (inference, p treated as 0)

        key = jax.random.PRNGKey(0) if key is None else key
        ks = jax.random.split(key, 5)
        s = 0.05
        hd = n_head * d_head
        # Weights stored pre-transposed as (in_features, out_features).
        self.qkv_w = s * jax.random.normal(ks[0], (n_embed, 3 * hd), jnp.float32)
        self.qkv_w1 = s * jax.random.normal(ks[1], (n_embed, 3 * hd), jnp.float32)
        self.r_w = s * jax.random.normal(ks[2], (n_embed, hd), jnp.float32)
        self.o_w = s * jax.random.normal(ks[3], (hd, n_embed), jnp.float32)
        self.o_w1 = s * jax.random.normal(ks[4], (hd, n_embed), jnp.float32)
        self.ln_g = jnp.ones((1, n_embed), jnp.float32)
        self.ln_b = jnp.zeros((1, n_embed), jnp.float32)

    def __call__(self, w_real, w_phase, r, r_w_bias, r_r_bias,
                 attn_mask=None, mems=None, mems_phase=None):
        # TODO(synk): attn_mask / mems / mems_phase branches not implemented.
        assert attn_mask is None and mems is None and mems_phase is None
        Q, B, E = w_real.shape
        R = r.shape[0]
        H, D = self.n_head, self.d_head
        HD = H * D
        K = Q                                   # klen == qlen when mems is None
        assert R == K, "rlen must equal klen (required by AC + rel-shifted BD)"
        # TODO(synk): support d_head not a multiple of 128 (needs a head-major
        # relayout instead of BlockSpec column offsets).
        assert D % 128 == 0, "d_head must be a multiple of 128 (lane width)"
        bf16 = self.mxu_bf16
        inter_dt = jnp.bfloat16 if bf16 else jnp.float32
        hw = self._hw

        # Batch-major (B, Q, E); every intermediate stays in this layout.
        rows_r = jnp.transpose(w_real, (1, 0, 2)).reshape(B * Q, E)
        rows_p = jnp.transpose(w_phase, (1, 0, 2)).reshape(B * Q, E)

        if self.pre_lnorm:
            rows_r_in = pallas_layernorm(rows_r, self.ln_g, self.ln_b, hw=hw)
            rows_p_in = pallas_layernorm(rows_p, self.ln_g, self.ln_b, hw=hw)
        else:
            rows_r_in, rows_p_in = rows_r, rows_p

        # ---- QKV / R projections (tiled; bf16 intermediates when enabled) ----
        heads_r = pallas_matmul(rows_r_in, self.qkv_w, out_dtype=inter_dt,
                                use_bf16=bf16, hw=hw).reshape(B, Q, 3 * HD)
        heads_p = pallas_matmul(rows_p_in, self.qkv_w1, out_dtype=inter_dt,
                                use_bf16=bf16, hw=hw).reshape(B, Q, 3 * HD)
        rk = pallas_matmul(r, self.r_w, out_dtype=inter_dt,
                           use_bf16=bf16, hw=hw)                    # (R, HD)

        # ---- fused attention: AC + in-VMEM rel-shifted BD + softmax + P@V ----
        tq = _pick_tile(Q, hw["row_tile"], 8)
        nq = Q // tq
        q_spec = pl.BlockSpec((1, Q, D), lambda b, h, qi: (b, 0, h))
        k_spec = pl.BlockSpec((1, Q, D), lambda b, h, qi: (b, 0, H + h))
        v_spec = pl.BlockSpec((1, Q, D), lambda b, h, qi: (b, 0, 2 * H + h))
        rk_spec = pl.BlockSpec((R, D), lambda b, h, qi: (0, h))
        bias_spec = pl.BlockSpec((H, D), lambda b, h, qi: (0, 0))
        out_spec = pl.BlockSpec((1, tq, D), lambda b, h, qi: (b, qi, h))

        av_r, av_p = pl.pallas_call(
            functools.partial(_attn_kernel, tq=tq, nq=nq, scale=self.scale,
                              use_bf16=bf16, approx_recip=self.approx_recip),
            grid=(B, H, nq),
            in_specs=[q_spec, k_spec, v_spec, q_spec, k_spec, v_spec,
                      rk_spec, bias_spec, bias_spec],
            out_specs=[out_spec, out_spec],
            out_shape=[jax.ShapeDtypeStruct((B, Q, HD), inter_dt),
                       jax.ShapeDtypeStruct((B, Q, HD), inter_dt)],
            compiler_params=pltpu.CompilerParams(
                dimension_semantics=("parallel", "parallel", "parallel"),
                vmem_limit_bytes=hw["vmem_limit"]),
        )(heads_r, heads_r, heads_r, heads_p, heads_p, heads_p,
          rk, r_w_bias, r_r_bias)

        # ---- output projection fused with residual + LayerNorm ----
        av_r = av_r.reshape(B * Q, HD)     # free reshape (already lane-major)
        av_p = av_p.reshape(B * Q, HD)
        out_r = pallas_out_proj_ln(av_r, self.o_w, rows_r, self.ln_g, self.ln_b,
                                   pre_lnorm=self.pre_lnorm, use_bf16=bf16, hw=hw)
        out_p = pallas_out_proj_ln(av_p, self.o_w1, rows_p, self.ln_g, self.ln_b,
                                   pre_lnorm=self.pre_lnorm, use_bf16=bf16, hw=hw)

        out_r = out_r.reshape(B, Q, E).transpose(1, 0, 2)
        out_p = out_p.reshape(B, Q, E).transpose(1, 0, 2)
        return out_r, out_p


# --------------------------------------------------------------------------
# Pure-JAX reference mirroring the PyTorch module (post-norm path)
# --------------------------------------------------------------------------
def _reference(mod, w_real, w_phase, r, r_w_bias, r_r_bias):
    with jax.default_matmul_precision("float32"):
        Q, B, E = w_real.shape
        R = r.shape[0]
        H, D = mod.n_head, mod.d_head

        heads_r = w_real @ mod.qkv_w
        heads_p = w_phase @ mod.qkv_w1
        r_head_k = (r @ mod.r_w).reshape(R, H, D)
        qr, kr, vr = jnp.split(heads_r, 3, axis=-1)
        qp, kp, vp = jnp.split(heads_p, 3, axis=-1)
        qr = qr.reshape(Q, B, H, D); qp = qp.reshape(Q, B, H, D)
        kr = kr.reshape(Q, B, H, D); kp = kp.reshape(Q, B, H, D)
        vr = vr.reshape(Q, B, H, D); vp = vp.reshape(Q, B, H, D)

        rwq_r = qr + r_w_bias
        rwq_p = qp + r_w_bias
        AC_real = (jnp.einsum('ibnd,jbnd->ijbn', rwq_r, kr)
                   - jnp.einsum('ibnd,jbnd->ijbn', rwq_p, kp))
        AC_phase = 2.0 * jnp.einsum('ibnd,jbnd->ijbn', rwq_r, kp)
        rrq_r = qr + r_r_bias
        rrq_p = qp + r_r_bias
        BD_real = jnp.einsum('ibnd,jnd->ijbn', rrq_r, r_head_k)
        BD_phase = jnp.einsum('ibnd,jnd->ijbn', rrq_p, r_head_k)

        def rel_shift(x):
            q, rr, b, n = x.shape
            zp = jnp.zeros((q, 1, b, n), x.dtype)
            xp = jnp.concatenate([zp, x], axis=1).reshape(rr + 1, q, b, n)
            return xp[1:].reshape(q, rr, b, n)

        BD_real = rel_shift(BD_real)
        BD_phase = rel_shift(BD_phase)
        AC = jnp.sqrt(AC_real ** 2 + AC_phase ** 2)
        BD = jnp.sqrt(BD_real ** 2 + BD_phase ** 2)
        score = (AC + BD) * mod.scale
        prob = jax.nn.softmax(score, axis=1)
        av_r = jnp.einsum('ijbn,jbnd->ibnd', prob, vr).reshape(Q, B, H * D)
        av_p = jnp.einsum('ijbn,jbnd->ibnd', prob, vp).reshape(Q, B, H * D)
        out_r = av_r @ mod.o_w
        out_p = av_p @ mod.o_w1

        def ln(x):
            m = x.mean(-1, keepdims=True)
            v = ((x - m) ** 2).mean(-1, keepdims=True)
            return (x - m) / jnp.sqrt(v + 1e-5) * mod.ln_g[0] + mod.ln_b[0]

        return ln(w_real + out_r), ln(w_phase + out_p)


# --------------------------------------------------------------------------
if __name__ == "__main__":
    n_head, n_embed, d_head = 2, 64, 128
    qlen = rlen = 128
    bsz = 2

    key = jax.random.PRNGKey(0)
    k_mod, k_wr, k_wp, k_r, k_rw, k_rr = jax.random.split(key, 6)

    w_real = jax.random.normal(k_wr, (qlen, bsz, n_embed), jnp.float32)
    w_phase = jax.random.normal(k_wp, (qlen, bsz, n_embed), jnp.float32)
    r = jax.random.normal(k_r, (rlen, n_embed), jnp.float32)
    r_w_bias = 0.02 * jax.random.normal(k_rw, (n_head, d_head), jnp.float32)
    r_r_bias = 0.02 * jax.random.normal(k_rr, (n_head, d_head), jnp.float32)

    # strict check with f32 MXU operands
    mod = RelPartialLearnableMultiHeadAttnPallas(
        n_head, n_embed, d_head, dropout=0.0, dropatt=0.0,
        pre_lnorm=False, mxu_bf16=False, key=k_mod)
    out_real, out_phase = mod(w_real, w_phase, r, r_w_bias, r_r_bias)
    jax.block_until_ready(out_real)
    jax.block_until_ready(out_phase)

    ref_real, ref_phase = _reference(mod, w_real, w_phase, r, r_w_bias, r_r_bias)
    if not (jnp.allclose(out_real, ref_real, atol=3e-3, rtol=3e-3) and
            jnp.allclose(out_phase, ref_phase, atol=3e-3, rtol=3e-3)):
        raise AssertionError("Pallas (f32) output mismatch vs JAX reference")

    # bf16-MXU path (production default on v5e/v6e/v7x): bf16 operands, f32
    # accumulation and f32 elementwise math; checked loosely against the
    # f32 reference (same weights, same key).
    mod_bf16 = RelPartialLearnableMultiHeadAttnPallas(
        n_head, n_embed, d_head, dropout=0.0, dropatt=0.0,
        pre_lnorm=False, mxu_bf16=True, key=k_mod)
    out_real_bf, out_phase_bf = mod_bf16(w_real, w_phase, r, r_w_bias, r_r_bias)
    jax.block_until_ready(out_real_bf)
    jax.block_until_ready(out_phase_bf)
    if not (jnp.allclose(out_real_bf, ref_real, atol=3e-2, rtol=3e-2) and
            jnp.allclose(out_phase_bf, ref_phase, atol=3e-2, rtol=3e-2)):
        raise AssertionError("Pallas (bf16 MXU) output mismatch vs JAX reference")

    print("KERNEL_OK")
</pallas_src>

<mosaic_0001>
module attributes {stable_mosaic.version = 11 : i64} {
  func.func @_matmul_kernel(%arg0: i32, %arg1: i32, %arg2: i32, %arg3: memref<256x64xf32, #tpu.memory_space<vmem>>, %arg4: memref<64x256xf32, #tpu.memory_space<vmem>>, %arg5: memref<256x256xf32, #tpu.memory_space<vmem>>, %arg6: memref<256x256xf32, #tpu.memory_space<vmem>>) attributes {dimension_semantics = [#tpu.dimension_semantics<parallel>, #tpu.dimension_semantics<parallel>, #tpu.dimension_semantics<arbitrary>], iteration_bounds = array<i64: 1, 3, 1>, scalar_prefetch = 0 : i64, scratch_operands = 1 : i64, tpu.core_type = #tpu.core_type<tc>, window_params = [{transform_indices = @transform_0, window_bounds = array<i64: 256, 64>}, {transform_indices = @transform_1, window_bounds = array<i64: 64, 256>}, {transform_indices = @transform_2, window_bounds = array<i64: 256, 256>}]} {
    %c0_i32 = arith.constant 0 : i32
    %0 = arith.cmpi eq, %arg2, %c0_i32 : i32
    %1 = arith.extui %0 : i1 to i32
    %c0_i32_0 = arith.constant 0 : i32
    %2 = arith.cmpi ne, %1, %c0_i32_0 : i32
    scf.if %2 {
      %cst_10 = arith.constant 0.000000e+00 : f32
      %12 = vector.broadcast %cst_10 : f32 to vector<256x256xf32>
      %c0_11 = arith.constant 0 : index
      %c0_12 = arith.constant 0 : index
      %13 = vector.load %arg6[%c0_11, %c0_12] : memref<256x256xf32, #tpu.memory_space<vmem>>, vector<256x256xf32>
      tpu.vector_store %arg6[%c0_11, %c0_12], %12 {strides = array<i32>} : memref<256x256xf32, #tpu.memory_space<vmem>>, vector<256x256xf32>,
    } else {
    }
    %c0 = arith.constant 0 : index
    %c0_1 = arith.constant 0 : index
    %3 = vector.load %arg6[%c0, %c0_1] : memref<256x256xf32, #tpu.memory_space<vmem>>, vector<256x256xf32>
    %c0_2 = arith.constant 0 : index
    %c0_3 = arith.constant 0 : index
    %4 = vector.load %arg3[%c0_2, %c0_3] : memref<256x64xf32, #tpu.memory_space<vmem>>, vector<256x64xf32>
    %c0_4 = arith.constant 0 : index
    %c0_5 = arith.constant 0 : index
    %5 = vector.load %arg4[%c0_4, %c0_5] : memref<64x256xf32, #tpu.memory_space<vmem>>, vector<64x256xf32>
    %cst = arith.constant dense<0.000000e+00> : vector<256x256xf32>
    %6 = tpu.matmul %4, %5, %cst {dimension_numbers = #tpu.dot_dimension_numbers<[1], [0], [0], [1], [0, 0, 1, 1], [], []>} : vector<256x64xf32>, vector<64x256xf32>, vector<256x256xf32> -> vector<256x256xf32>
    %7 = arith.addf %3, %6 : vector<256x256xf32>
    %c0_6 = arith.constant 0 : index
    %c0_7 = arith.constant 0 : index
    %8 = vector.load %arg6[%c0_6, %c0_7] : memref<256x256xf32, #tpu.memory_space<vmem>>, vector<256x256xf32>
    tpu.vector_store %arg6[%c0_6, %c0_7], %7 {strides = array<i32>} : memref<256x256xf32, #tpu.memory_space<vmem>>, vector<256x256xf32>,
    %c0_i32_8 = arith.constant 0 : i32
    %9 = arith.cmpi eq, %arg2, %c0_i32_8 : i32
    %10 = arith.extui %9 : i1 to i32
    %c0_i32_9 = arith.constant 0 : i32
    %11 = arith.cmpi ne, %10, %c0_i32_9 : i32
    scf.if %11 {
      %c0_10 = arith.constant 0 : index
      %c0_11 = arith.constant 0 : index
      %12 = vector.load %arg6[%c0_10, %c0_11] : memref<256x256xf32, #tpu.memory_space<vmem>>, vector<256x256xf32>
      %c0_12 = arith.constant 0 : index
      %c0_13 = arith.constant 0 : index
      %13 = vector.load %arg5[%c0_12, %c0_13] : memref<256x256xf32, #tpu.memory_space<vmem>>, vector<256x256xf32>
      tpu.vector_store %arg5[%c0_12, %c0_13], %12 {strides = array<i32>} : memref<256x256xf32, #tpu.memory_space<vmem>>, vector<256x256xf32>,
    } else {
    }
    return
  }
  func.func @transform_0(%arg0: i32, %arg1: i32, %arg2: i32) -> (i32, i32) {
    %c0_i32 = arith.constant 0 : i32
    return %arg0, %arg2 : i32, i32
  }
  func.func @transform_1(%arg0: i32, %arg1: i32, %arg2: i32) -> (i32, i32) {
    %c0_i32 = arith.constant 0 : i32
    return %arg2, %arg1 : i32, i32
  }
  func.func @transform_2(%arg0: i32, %arg1: i32, %arg2: i32) -> (i32, i32) {
    %c0_i32 = arith.constant 0 : i32
    return %arg0, %arg1 : i32, i32
  }
}

</mosaic_0001>

<llo_original>
// kernel: tpu_custom_call.1
$region0: #{tpu_custom_call.1}
  #allocation0 [shape = 'u32[]', space=smem, size = 0x4, offset = 0x4, fixed_abs, tag = 'smem constant byte address 0x4 - core index']
  #allocation1 [shape = 'u32[144,128]{1,0:T(1,128)}', space=vmem, size = 0x12000, scoped, tag = 'internal scratch']
  #allocation2 [shape = 'f32[256,256]{1,0:T(8,128)}', space=vmem, size = 0x40000, scoped, tag = 'scratch operand']
  %s0 = inlined_call_operand.vmem [shape: f32[256,64], index: 0, kind: input, shape index: {}]
  %s1 = inlined_call_operand.vmem [shape: f32[64,768], index: 1, kind: input, shape index: {}]
  %s2 = inlined_call_operand.hbm [shape: f32[256,768], index: 2, kind: output, shape index: {}]
  %s3 = sld [smem:[#allocation0]]
  $region72: #{tpu_custom_call.1} parent=0
    _
  %s5 = ssub.s32 1, %s3
  %s6 = scalar_select 0, %s5, %s3
  $region1: #{tpu_custom_call.1} parent=0
    #allocation3 [shape = 'u8[131072]{0}', space=vmem, size = 0x20000, scoped, tag = 'input window, operand 1']
    #allocation4 [shape = 'u8[524288]{0}', space=vmem, size = 0x80000, scoped, tag = 'output window, operand 0']
    #allocation5 [shape = 's32[2]{0}', space=sflag, size = 0x8, scoped, tag = 'scoped memory for tpu_custom_call.1']
    %7 = vsyncpa [#allocation5], 0
    %s8 = scalar_lea.sflag [#allocation5], 1
    %9 = vsyncpa %s8, 0
    loop: start=0, step=1, limit=5
    $region2: #{tpu_custom_call.1} parent=1 // loop_pre_header
      _
    $region3: #{tpu_custom_call.1} parent=1 // loop_header
      %s11 = sphi 0, %s15
      %p12 = scmp.ge.s32.totalorder %s11, 5
      %s18 = sphi 0, %s37
      %s19 = sphi 0, %s33
      %s20 = sphi 0, %s29
      %s21 = sphi 0, %s18
      %s22 = sphi 0, %s19
      %s23 = sphi 0, %s20
      %s24 = sphi 0, %s21
      %s25 = sphi 0, %s22
      %s26 = sphi 0, %s23
      %s42 = sphi 0, %s44
      %s45 = sphi 0, %s42
      %s46 = sphi 0, %s45
      %s62 = sphi 0, %s46
      %s70 = sphi 0, %s72
      %s73 = sphi 0, %s70
      %s74 = sphi 0, %s73
      %s90 = sphi 0, %s74
      %s98 = sphi 0, %s100
      %s101 = sphi 0, %s98
      %s102 = sphi 0, %s101
      %s118 = sphi 0, %s102
    $region4: #{tpu_custom_call.1} parent=1 // loop_header_branch
      %14 = sbr.rel (%p12) target = $region8
    $region5: #{tpu_custom_call.1} parent=1 // loop_body
      %s16 = ssub.s32 %s11, 1
      %s17 = ssub.s32 %s11, 2
      %s27 = sadd.s32 1, %s20
      %p28 = scmp.ge.s32.totalorder %s27, 1
      %s29 = scalar_select %p28, 0, %s27
      %s30 = sadd.s32 1, %s19
      %s31 = scalar_select %p28, %s30, %s19
      %p32 = scmp.ge.s32.totalorder %s31, 3
      %s33 = scalar_select %p32, 0, %s31
      %s34 = sadd.s32 1, %s18
      %s35 = scalar_select %p32, %s34, %s18
      %p36 = scmp.ge.s32.totalorder %s35, 1
      %s37 = scalar_select %p36, 0, %s35
      %s38 = ssub.s32 %s18, %s37
      %s39 = ssub.s32 %s20, %s29
      %s40 = sor.u32 %s38, %s39
      %p41 = scmp.eq.s32.totalorder %s40, 0
      %s43 = sadd.s32 %s42, 1
      %s44 = scalar_select %p41, %s42, %s43
      %p47 = pneg %p41
      %p48 = scmp.eq.s32.totalorder %s11, 2
      %p49 = por %p47, %p48
      %p50 = scmp.ne.s32.totalorder %s42, %s45
      %p51 = scmp.eq.s32.totalorder %s11, 0
      %p52 = por %p50, %p51
      %p53 = scmp.ne.s32.totalorder %s42, %s45
      %p54 = scmp.eq.s32.totalorder %s16, 2
      %p55 = por %p53, %p54
      %p56 = scmp.ne.s32.totalorder %s45, %s46
      %p57 = scmp.eq.s32.totalorder %s16, 0
      %p58 = por %p56, %p57
      %p59 = scmp.ne.s32.totalorder %s45, %s46
      %p60 = scmp.eq.s32.totalorder %s17, 2
      %p61 = por %p59, %p60
      %p63 = scmp.ne.s32.totalorder %s46, %s62
      %p64 = scmp.eq.s32.totalorder %s17, 0
      %p65 = por %p63, %p64
      %s66 = ssub.s32 %s20, %s29
      %s67 = ssub.s32 %s19, %s33
      %s68 = sor.u32 %s66, %s67
      %p69 = scmp.eq.s32.totalorder %s68, 0
      %s71 = sadd.s32 %s70, 1
      %s72 = scalar_select %p69, %s70, %s71
      %p75 = pneg %p69
      %p76 = scmp.eq.s32.totalorder %s11, 2
      %p77 = por %p75, %p76
      %p78 = scmp.ne.s32.totalorder %s70, %s73
      %p79 = scmp.eq.s32.totalorder %s11, 0
      %p80 = por %p78, %p79
      %p81 = scmp.ne.s32.totalorder %s70, %s73
      %p82 = scmp.eq.s32.totalorder %s16, 2
      %p83 = por %p81, %p82
      %p84 = scmp.ne.s32.totalorder %s73, %s74
      %p85 = scmp.eq.s32.totalorder %s16, 0
      %p86 = por %p84, %p85
      %p87 = scmp.ne.s32.totalorder %s73, %s74
      %p88 = scmp.eq.s32.totalorder %s17, 2
      %p89 = por %p87, %p88
      %p91 = scmp.ne.s32.totalorder %s74, %s90
      %p92 = scmp.eq.s32.totalorder %s17, 0
      %p93 = por %p91, %p92
      %s94 = ssub.s32 %s18, %s37
      %s95 = ssub.s32 %s19, %s33
      %s96 = sor.u32 %s94, %s95
      %p97 = scmp.eq.s32.totalorder %s96, 0
      %s99 = sadd.s32 %s98, 1
      %s100 = scalar_select %p97, %s98, %s99
      %p103 = pneg %p97
      %p104 = scmp.eq.s32.totalorder %s11, 2
      %p105 = por %p103, %p104
      %p106 = scmp.ne.s32.totalorder %s98, %s101
      %p107 = scmp.eq.s32.totalorder %s11, 0
      %p108 = por %p106, %p107
      %p109 = scmp.ne.s32.totalorder %s98, %s101
      %p110 = scmp.eq.s32.totalorder %s16, 2
      %p111 = por %p109, %p110
      %p112 = scmp.ne.s32.totalorder %s101, %s102
      %p113 = scmp.eq.s32.totalorder %s16, 0
      %p114 = por %p112, %p113
      %p115 = scmp.ne.s32.totalorder %s101, %s102
      %p116 = scmp.eq.s32.totalorder %s17, 2
      %p117 = por %p115, %p116
      %p119 = scmp.ne.s32.totalorder %s102, %s118
      %p120 = scmp.eq.s32.totalorder %s17, 0
      %p121 = por %p119, %p120
      %p122 = scmp.le.s32.totalorder 1, %s11
      %p123 = scmp.lt.s32.totalorder %s11, 4
      %p124 = pnand %p122, %p123
      %p125 = pneg %p124
      // Predicated region
      $region9: #{tpu_custom_call.1} parent=5 // pred_check
        _
      $region10: #{tpu_custom_call.1} parent=5 // pred_check_branch
        %127 = sbr.rel (%p124) target = $region12
      $region11: #{tpu_custom_call.1} parent=5 // pred_region
        %s128 = ssub.s32 %s11, 1
        // Predicated region
        $region13: #{tpu_custom_call.1} parent=11 // pred_check
          %p129 = pneg %p58
        $region14: #{tpu_custom_call.1} parent=11 // pred_check_branch
          %131 = sbr.rel (%p129) target = $region16
        $region15: #{tpu_custom_call.1} parent=11 // pred_region
          %s132 = smul.u32 32, %s21
          %p133 = scmp.lt.s32.totalorder %s132, 31
          %s134 = scalar_select %p133, %s132, 31
          %p135 = scmp.lt.s32.totalorder %s23, 0
          %s136 = scalar_select %p135, %s23, 0
          %s137 = sadd.s32 %s136, %s134
          %s138 = smul.addr %s137, 8
          %s139 = scalar_lea.vmem %s0, %s138
          %s140 = smul.u32 32, %s21
        $region16: #{tpu_custom_call.1} parent=11 // pred_fallthru
          _
      $region12: #{tpu_custom_call.1} parent=5 // pred_fallthru
        _
      %p141 = scmp.lt.s32.totalorder %s11, 3
      // Predicated region
      $region17: #{tpu_custom_call.1} parent=5 // pred_check
        %p142 = pneg %p141
      $region18: #{tpu_custom_call.1} parent=5 // pred_check_branch
        %144 = sbr.rel (%p142) target = $region20
      $region19: #{tpu_custom_call.1} parent=5 // pred_region
        // Predicated region
        $region21: #{tpu_custom_call.1} parent=19 // pred_check
          %p145 = pneg %p80
        $region22: #{tpu_custom_call.1} parent=19 // pred_check_branch
          %147 = sbr.rel (%p145) target = $region24
        $region23: #{tpu_custom_call.1} parent=19 // pred_region
          %s148 = sand.u32 %s70, 1
          %s149 = sand.u32 %s70, 1
          %s150 = smul.addr %s149, 128
          %s151 = scalar_lea.vmem [#allocation3], %s150
          %s152 = smul.u32 8, %s20
          %s153 = smul.u32 2, %s19
          %s154 = smul.addr %s152, 6
          %s155 = sadd.s32 %s153, %s154
          %s156 = smul.addr %s155, 8
          %s157 = scalar_lea.vmem %s1, %s156
          // Predicated region
          $region25: #{tpu_custom_call.1} parent=23 // pred_check
            _
          $region26: #{tpu_custom_call.1} parent=23 // pred_check_branch
            %159 = sbr.rel (0) target = $region28
          $region27: #{tpu_custom_call.1} parent=23 // pred_region
            // Predicated region
            $region29: #{tpu_custom_call.1} parent=27 // pred_check
              _
            $region30: #{tpu_custom_call.1} parent=27 // pred_check_branch
              %161 = sbr.rel (0) target = $region32
            $region31: #{tpu_custom_call.1} parent=27 // pred_region
              loop: start=0, step=1, limit=1
              $region33: #{tpu_custom_call.1} parent=31 // loop_pre_header
                _
              $region34: #{tpu_custom_call.1} parent=31 // loop_header
                %s163 = sphi 0, %s167
                %p164 = scmp.ge.s32.totalorder %s163, 1
                %s168 = sphi %s157, %s157
                %s169 = sphi %s151, %s151
              $region35: #{tpu_custom_call.1} parent=31 // loop_header_branch
                %166 = sbr.rel (%p164) target = $region39
              $region36: #{tpu_custom_call.1} parent=31 // loop_body
                %v170 = vld [vmem:[%s168] sm:$0xff]
                %171 = vst [vmem:[%s169] sm:$0xff] %v170
                %v172 = vld [vmem:[%s168 + $0x8] sm:$0xff]
                %173 = vst [vmem:[%s169 + $0x8] sm:$0xff] %v172
                %v174 = vld [vmem:[%s168 + $0x30] sm:$0xff]
                %175 = vst [vmem:[%s169 + $0x10] sm:$0xff] %v174
                %v176 = vld [vmem:[%s168 + $0x38] sm:$0xff]
                %177 = vst [vmem:[%s169 + $0x18] sm:$0xff] %v176
                %v178 = vld [vmem:[%s168 + $0x60] sm:$0xff]
                %179 = vst [vmem:[%s169 + $0x20] sm:$0xff] %v178
                %v180 = vld [vmem:[%s168 + $0x68] sm:$0xff]
                %181 = vst [vmem:[%s169 + $0x28] sm:$0xff] %v180
                %v182 = vld [vmem:[%s168 + $0x90] sm:$0xff]
                %183 = vst [vmem:[%s169 + $0x30] sm:$0xff] %v182
                %v184 = vld [vmem:[%s168 + $0x98] sm:$0xff]
                %185 = vst [vmem:[%s169 + $0x38] sm:$0xff] %v184
                %v186 = vld [vmem:[%s168 + $0xc0] sm:$0xff]
                %187 = vst [vmem:[%s169 + $0x40] sm:$0xff] %v186
                %v188 = vld [vmem:[%s168 + $0xc8] sm:$0xff]
                %189 = vst [vmem:[%s169 + $0x48] sm:$0xff] %v188
                %v190 = vld [vmem:[%s168 + $0xf0] sm:$0xff]
                %191 = vst [vmem:[%s169 + $0x50] sm:$0xff] %v190
                %v192 = vld [vmem:[%s168 + $0xf8] sm:$0xff]
                %193 = vst [vmem:[%s169 + $0x58] sm:$0xff] %v192
                %v194 = vld [vmem:[%s168 + $0x120] sm:$0xff]
                %195 = vst [vmem:[%s169 + $0x60] sm:$0xff] %v194
                %v196 = vld [vmem:[%s168 + $0x128] sm:$0xff]
                %197 = vst [vmem:[%s169 + $0x68] sm:$0xff] %v196
                %v198 = vld [vmem:[%s168 + $0x150] sm:$0xff]
                %199 = vst [vmem:[%s169 + $0x70] sm:$0xff] %v198
                %v200 = vld [vmem:[%s168 + $0x158] sm:$0xff]
                %201 = vst [vmem:[%s169 + $0x78] sm:$0xff] %v200
              $region37: #{tpu_custom_call.1} parent=31 // loop_footer
                %s167 = sadd.s32 1, %s163
              $region38: #{tpu_custom_call.1} parent=31 // loop_footer_branch
                %162 = sbr.rel target = $region34
              $region39: #{tpu_custom_call.1} parent=31 // loop_exit
                _
            $region32: #{tpu_custom_call.1} parent=27 // pred_fallthru
              _
            // Predicated region
            $region40: #{tpu_custom_call.1} parent=27 // pred_check
              _
            $region41: #{tpu_custom_call.1} parent=27 // pred_check_branch
              %203 = sbr.rel target = $region43
            $region42: #{tpu_custom_call.1} parent=27 // pred_region
              _
            $region43: #{tpu_custom_call.1} parent=27 // pred_fallthru
              _
          $region28: #{tpu_custom_call.1} parent=23 // pred_fallthru
            _
          %204 = vnop
        $region24: #{tpu_custom_call.1} parent=19 // pred_fallthru
          _
      $region20: #{tpu_custom_call.1} parent=5 // pred_fallthru
        _
      %p205 = scmp.le.s32.totalorder 1, %s11
      %p206 = scmp.lt.s32.totalorder %s11, 4
      %p207 = pnand %p205, %p206
      %p208 = pneg %p207
      // Predicated region
      $region44: #{tpu_custom_call.1} parent=5 // pred_check
        _
      $region45: #{tpu_custom_call.1} parent=5 // pred_check_branch
        %210 = sbr.rel (%p207) target = $region47
      $region46: #{tpu_custom_call.1} parent=5 // pred_region
        %s211 = ssub.s32 %s11, 1
        %s212 = sand.u32 %s73, 1
        %s213 = sand.u32 %s73, 1
        %s214 = smul.addr %s213, 128
        %s215 = scalar_lea.vmem [#allocation3], %s214
        // Predicated region
        $region48: #{tpu_custom_call.1} parent=46 // pred_check
          %p216 = pneg %p86
        $region49: #{tpu_custom_call.1} parent=46 // pred_check_branch
          %218 = sbr.rel (%p216) target = $region51
        $region50: #{tpu_custom_call.1} parent=46 // pred_region
          _
        $region51: #{tpu_custom_call.1} parent=46 // pred_fallthru
          _
        %s219 = smul.u32 32, %s21
        %p220 = scmp.lt.s32.totalorder %s219, 31
        %s221 = scalar_select %p220, %s219, 31
        %p222 = scmp.lt.s32.totalorder %s23, 0
        %s223 = scalar_select %p222, %s23, 0
        %s224 = sadd.s32 %s223, %s221
        %s225 = smul.addr %s224, 8
        %s226 = scalar_lea.vmem %s0, %s225
        %p227 = pneg %p58
        %p228 = pneg %p55
        %s229 = sand.u32 %s73, 1
        %s230 = sand.u32 %s73, 1
        %s231 = smul.addr %s230, 128
        %s232 = scalar_lea.vmem [#allocation3], %s231
        %p233 = pneg %p86
        %p234 = pneg %p83
        %p235 = pneg %p114
        %p236 = pneg %p111
        %s237 = sand.u32 %s101, 1
        %s238 = scalar_lea.sflag [#allocation5], %s237
        %s239 = sand.u32 %s101, 1
        %s240 = smul.addr %s239, 512
        %s241 = scalar_lea.vmem [#allocation4], %s240
        %s242 = smul.u32 32, %s21
        %p243 = scmp.lt.s32.totalorder %s242, 31
        %s244 = scalar_select %p243, %s242, 31
        %p245 = scmp.lt.s32.totalorder %s23, 0
        %s246 = scalar_select %p245, %s23, 0
        %s247 = sadd.s32 %s246, %s244
        %s248 = smul.addr %s247, 8
        %s249 = scalar_lea.vmem %s0, %s248
        %s250 = smul.u32 32, %s21
        %s251 = smul.u32 8, %s23
        %s252 = smul.u32 2, %s22
        %s253 = smul.u32 32, %s21
        %s254 = smul.u32 2, %s22
        %p255 = scmp.eq.s32.totalorder %s23, 0
        // Predicated region
        $region52: #{tpu_custom_call.1} parent=46 // pred_check
          %p256 = pneg %p255
        $region53: #{tpu_custom_call.1} parent=46 // pred_check_branch
          %258 = sbr.rel (%p256) target = $region55
        $region54: #{tpu_custom_call.1} parent=46 // pred_region
          %259 = vst [vmem:[#allocation2] sm:$0xff] 0.0
          %260 = vst [vmem:[#allocation2 + $0x8] sm:$0xff] 0.0
          %261 = vst [vmem:[#allocation2 + $0x10] sm:$0xff] 0.0
          %262 = vst [vmem:[#allocation2 + $0x18] sm:$0xff] 0.0
          %263 = vst [vmem:[#allocation2 + $0x20] sm:$0xff] 0.0
          %264 = vst [vmem:[#allocation2 + $0x28] sm:$0xff] 0.0
          %265 = vst [vmem:[#allocation2 + $0x30] sm:$0xff] 0.0
          %266 = vst [vmem:[#allocation2 + $0x38] sm:$0xff] 0.0
          %267 = vst [vmem:[#allocation2 + $0x40] sm:$0xff] 0.0
          %268 = vst [vmem:[#allocation2 + $0x48] sm:$0xff] 0.0
          %269 = vst [vmem:[#allocation2 + $0x50] sm:$0xff] 0.0
          %270 = vst [vmem:[#allocation2 + $0x58] sm:$0xff] 0.0
          %271 = vst [vmem:[#allocation2 + $0x60] sm:$0xff] 0.0
          %272 = vst [vmem:[#allocation2 + $0x68] sm:$0xff] 0.0
          %273 = vst [vmem:[#allocation2 + $0x70] sm:$0xff] 0.0
          %274 = vst [vmem:[#allocation2 + $0x78] sm:$0xff] 0.0
          %275 = vst [vmem:[#allocation2 + $0x80] sm:$0xff] 0.0
          %276 = vst [vmem:[#allocation2 + $0x88] sm:$0xff] 0.0
          %277 = vst [vmem:[#allocation2 + $0x90] sm:$0xff] 0.0
          %278 = vst [vmem:[#allocation2 + $0x98] sm:$0xff] 0.0
          %279 = vst [vmem:[#allocation2 + $0xa0] sm:$0xff] 0.0
          %280 = vst [vmem:[#allocation2 + $0xa8] sm:$0xff] 0.0
          %281 = vst [vmem:[#allocation2 + $0xb0] sm:$0xff] 0.0
          %282 = vst [vmem:[#allocation2 + $0xb8] sm:$0xff] 0.0
          %283 = vst [vmem:[#allocation2 + $0xc0] sm:$0xff] 0.0
          %284 = vst [vmem:[#allocation2 + $0xc8] sm:$0xff] 0.0
          %285 = vst [vmem:[#allocation2 + $0xd0] sm:$0xff] 0.0
          %286 = vst [vmem:[#allocation2 + $0xd8] sm:$0xff] 0.0
          %287 = vst [vmem:[#allocation2 + $0xe0] sm:$0xff] 0.0
          %288 = vst [vmem:[#allocation2 + $0xe8] sm:$0xff] 0.0
          %289 = vst [vmem:[#allocation2 + $0xf0] sm:$0xff] 0.0
          %290 = vst [vmem:[#allocation2 + $0xf8] sm:$0xff] 0.0
          %291 = vst [vmem:[#allocation2 + $0x100] sm:$0xff] 0.0
          %292 = vst [vmem:[#allocation2 + $0x108] sm:$0xff] 0.0
          %293 = vst [vmem:[#allocation2 + $0x110] sm:$0xff] 0.0
          %294 = vst [vmem:[#allocation2 + $0x118] sm:$0xff] 0.0
          %295 = vst [vmem:[#allocation2 + $0x120] sm:$0xff] 0.0
          %296 = vst [vmem:[#allocation2 + $0x128] sm:$0xff] 0.0
          %297 = vst [vmem:[#allocation2 + $0x130] sm:$0xff] 0.0
          %298 = vst [vmem:[#allocation2 + $0x138] sm:$0xff] 0.0
          %299 = vst [vmem:[#allocation2 + $0x140] sm:$0xff] 0.0
          %300 = vst [vmem:[#allocation2 + $0x148] sm:$0xff] 0.0
          %301 = vst [vmem:[#allocation2 + $0x150] sm:$0xff] 0.0
          %302 = vst [vmem:[#allocation2 + $0x158] sm:$0xff] 0.0
          %303 = vst [vmem:[#allocation2 + $0x160] sm:$0xff] 0.0
          %304 = vst [vmem:[#allocation2 + $0x168] sm:$0xff] 0.0
          %305 = vst [vmem:[#allocation2 + $0x170] sm:$0xff] 0.0
          %306 = vst [vmem:[#allocation2 + $0x178] sm:$0xff] 0.0
          %307 = vst [vmem:[#allocation2 + $0x180] sm:$0xff] 0.0
          %308 = vst [vmem:[#allocation2 + $0x188] sm:$0xff] 0.0
          %309 = vst [vmem:[#allocation2 + $0x190] sm:$0xff] 0.0
          %310 = vst [vmem:[#allocation2 + $0x198] sm:$0xff] 0.0
          %311 = vst [vmem:[#allocation2 + $0x1a0] sm:$0xff] 0.0
          %312 = vst [vmem:[#allocation2 + $0x1a8] sm:$0xff] 0.0
          %313 = vst [vmem:[#allocation2 + $0x1b0] sm:$0xff] 0.0
          %314 = vst [vmem:[#allocation2 + $0x1b8] sm:$0xff] 0.0
          %315 = vst [vmem:[#allocation2 + $0x1c0] sm:$0xff] 0.0
          %316 = vst [vmem:[#allocation2 + $0x1c8] sm:$0xff] 0.0
          %317 = vst [vmem:[#allocation2 + $0x1d0] sm:$0xff] 0.0
          %318 = vst [vmem:[#allocation2 + $0x1d8] sm:$0xff] 0.0
          %319 = vst [vmem:[#allocation2 + $0x1e0] sm:$0xff] 0.0
          %320 = vst [vmem:[#allocation2 + $0x1e8] sm:$0xff] 0.0
          %321 = vst [vmem:[#allocation2 + $0x1f0] sm:$0xff] 0.0
          %322 = vst [vmem:[#allocation2 + $0x1f8] sm:$0xff] 0.0
        $region55: #{tpu_custom_call.1} parent=46 // pred_fallthru
          _
        %v323 = vld [vmem:[#allocation2] sm:$0xff]
        %v324 = vld [vmem:[#allocation2 + $0x8] sm:$0xff]
        %v325 = vld [vmem:[#allocation2 + $0x10] sm:$0xff]
        %v326 = vld [vmem:[#allocation2 + $0x18] sm:$0xff]
        %v327 = vld [vmem:[#allocation2 + $0x20] sm:$0xff]
        %v328 = vld [vmem:[#allocation2 + $0x28] sm:$0xff]
        %v329 = vld [vmem:[#allocation2 + $0x30] sm:$0xff]
        %v330 = vld [vmem:[#allocation2 + $0x38] sm:$0xff]
        %v331 = vld [vmem:[#allocation2 + $0x40] sm:$0xff]
        %v332 = vld [vmem:[#allocation2 + $0x48] sm:$0xff]
        %v333 = vld [vmem:[#allocation2 + $0x50] sm:$0xff]
        %v334 = vld [vmem:[#allocation2 + $0x58] sm:$0xff]
        %v335 = vld [vmem:[#allocation2 + $0x60] sm:$0xff]
        %v336 = vld [vmem:[#allocation2 + $0x68] sm:$0xff]
        %v337 = vld [vmem:[#allocation2 + $0x70] sm:$0xff]
        %v338 = vld [vmem:[#allocation2 + $0x78] sm:$0xff]
        %v339 = vld [vmem:[#allocation2 + $0x80] sm:$0xff]
        %v340 = vld [vmem:[#allocation2 + $0x88] sm:$0xff]
        %v341 = vld [vmem:[#allocation2 + $0x90] sm:$0xff]
        %v342 = vld [vmem:[#allocation2 + $0x98] sm:$0xff]
        %v343 = vld [vmem:[#allocation2 + $0xa0] sm:$0xff]
        %v344 = vld [vmem:[#allocation2 + $0xa8] sm:$0xff]
        %v345 = vld [vmem:[#allocation2 + $0xb0] sm:$0xff]
        %v346 = vld [vmem:[#allocation2 + $0xb8] sm:$0xff]
        %v347 = vld [vmem:[#allocation2 + $0xc0] sm:$0xff]
        %v348 = vld [vmem:[#allocation2 + $0xc8] sm:$0xff]
        %v349 = vld [vmem:[#allocation2 + $0xd0] sm:$0xff]
        %v350 = vld [vmem:[#allocation2 + $0xd8] sm:$0xff]
        %v351 = vld [vmem:[#allocation2 + $0xe0] sm:$0xff]
        %v352 = vld [vmem:[#allocation2 + $0xe8] sm:$0xff]
        %v353 = vld [vmem:[#allocation2 + $0xf0] sm:$0xff]
        %v354 = vld [vmem:[#allocation2 + $0xf8] sm:$0xff]
        %v355 = vld [vmem:[#allocation2 + $0x100] sm:$0xff]
        %v356 = vld [vmem:[#allocation2 + $0x108] sm:$0xff]
        %v357 = vld [vmem:[#allocation2 + $0x110] sm:$0xff]
        %v358 = vld [vmem:[#allocation2 + $0x118] sm:$0xff]
        %v359 = vld [vmem:[#allocation2 + $0x120] sm:$0xff]
        %v360 = vld [vmem:[#allocation2 + $0x128] sm:$0xff]
        %v361 = vld [vmem:[#allocation2 + $0x130] sm:$0xff]
        %v362 = vld [vmem:[#allocation2 + $0x138] sm:$0xff]
        %v363 = vld [vmem:[#allocation2 + $0x140] sm:$0xff]
        %v364 = vld [vmem:[#allocation2 + $0x148] sm:$0xff]
        %v365 = vld [vmem:[#allocation2 + $0x150] sm:$0xff]
        %v366 = vld [vmem:[#allocation2 + $0x158] sm:$0xff]
        %v367 = vld [vmem:[#allocation2 + $0x160] sm:$0xff]
        %v368 = vld [vmem:[#allocation2 + $0x168] sm:$0xff]
        %v369 = vld [vmem:[#allocation2 + $0x170] sm:$0xff]
        %v370 = vld [vmem:[#allocation2 + $0x178] sm:$0xff]
        %v371 = vld [vmem:[#allocation2 + $0x180] sm:$0xff]
        %v372 = vld [vmem:[#allocation2 + $0x188] sm:$0xff]
        %v373 = vld [vmem:[#allocation2 + $0x190] sm:$0xff]
        %v374 = vld [vmem:[#allocation2 + $0x198] sm:$0xff]
        %v375 = vld [vmem:[#allocation2 + $0x1a0] sm:$0xff]
        %v376 = vld [vmem:[#allocation2 + $0x1a8] sm:$0xff]
        %v377 = vld [vmem:[#allocation2 + $0x1b0] sm:$0xff]
        %v378 = vld [vmem:[#allocation2 + $0x1b8] sm:$0xff]
        %v379 = vld [vmem:[#allocation2 + $0x1c0] sm:$0xff]
        %v380 = vld [vmem:[#allocation2 + $0x1c8] sm:$0xff]
        %v381 = vld [vmem:[#allocation2 + $0x1d0] sm:$0xff]
        %v382 = vld [vmem:[#allocation2 + $0x1d8] sm:$0xff]
        %v383 = vld [vmem:[#allocation2 + $0x1e0] sm:$0xff]
        %v384 = vld [vmem:[#allocation2 + $0x1e8] sm:$0xff]
        %v385 = vld [vmem:[#allocation2 + $0x1f0] sm:$0xff]
        %v386 = vld [vmem:[#allocation2 + $0x1f8] sm:$0xff]
        %v387 = vld [vmem:[%s249] sm:$0xff]
        %v388 = vld [vmem:[%s249 + $0x8] sm:$0xff]
        %v389 = vld [vmem:[%s249 + $0x10] sm:$0xff]
        %v390 = vld [vmem:[%s249 + $0x18] sm:$0xff]
        %v391 = vld [vmem:[%s249 + $0x20] sm:$0xff]
        %v392 = vld [vmem:[%s249 + $0x28] sm:$0xff]
        %v393 = vld [vmem:[%s249 + $0x30] sm:$0xff]
        %v394 = vld [vmem:[%s249 + $0x38] sm:$0xff]
        %v395 = vld [vmem:[%s249 + $0x40] sm:$0xff]
        %v396 = vld [vmem:[%s249 + $0x48] sm:$0xff]
        %v397 = vld [vmem:[%s249 + $0x50] sm:$0xff]
        %v398 = vld [vmem:[%s249 + $0x58] sm:$0xff]
        %v399 = vld [vmem:[%s249 + $0x60] sm:$0xff]
        %v400 = vld [vmem:[%s249 + $0x68] sm:$0xff]
        %v401 = vld [vmem:[%s249 + $0x70] sm:$0xff]
        %v402 = vld [vmem:[%s249 + $0x78] sm:$0xff]
        %v403 = vld [vmem:[%s249 + $0x80] sm:$0xff]
        %v404 = vld [vmem:[%s249 + $0x88] sm:$0xff]
        %v405 = vld [vmem:[%s249 + $0x90] sm:$0xff]
        %v406 = vld [vmem:[%s249 + $0x98] sm:$0xff]
        %v407 = vld [vmem:[%s249 + $0xa0] sm:$0xff]
        %v408 = vld [vmem:[%s249 + $0xa8] sm:$0xff]
        %v409 = vld [vmem:[%s249 + $0xb0] sm:$0xff]
        %v410 = vld [vmem:[%s249 + $0xb8] sm:$0xff]
        %v411 = vld [vmem:[%s249 + $0xc0] sm:$0xff]
        %v412 = vld [vmem:[%s249 + $0xc8] sm:$0xff]
        %v413 = vld [vmem:[%s249 + $0xd0] sm:$0xff]
        %v414 = vld [vmem:[%s249 + $0xd8] sm:$0xff]
        %v415 = vld [vmem:[%s249 + $0xe0] sm:$0xff]
        %v416 = vld [vmem:[%s249 + $0xe8] sm:$0xff]
        %v417 = vld [vmem:[%s249 + $0xf0] sm:$0xff]
        %v418 = vld [vmem:[%s249 + $0xf8] sm:$0xff]
        %v419 = vld [vmem:[%s215] sm:$0xff]
        %v420 = vld [vmem:[%s215 + $0x8] sm:$0xff]
        %v421 = vld [vmem:[%s215 + $0x10] sm:$0xff]
        %v422 = vld [vmem:[%s215 + $0x18] sm:$0xff]
        %v423 = vld [vmem:[%s215 + $0x20] sm:$0xff]
        %v424 = vld [vmem:[%s215 + $0x28] sm:$0xff]
        %v425 = vld [vmem:[%s215 + $0x30] sm:$0xff]
        %v426 = vld [vmem:[%s215 + $0x38] sm:$0xff]
        %v427 = vld [vmem:[%s215 + $0x40] sm:$0xff]
        %v428 = vld [vmem:[%s215 + $0x48] sm:$0xff]
        %v429 = vld [vmem:[%s215 + $0x50] sm:$0xff]
        %v430 = vld [vmem:[%s215 + $0x58] sm:$0xff]
        %v431 = vld [vmem:[%s215 + $0x60] sm:$0xff]
        %v432 = vld [vmem:[%s215 + $0x68] sm:$0xff]
        %v433 = vld [vmem:[%s215 + $0x70] sm:$0xff]
        %v434 = vld [vmem:[%s215 + $0x78] sm:$0xff]
        %vm435 = vcmask 523264
        %v437 = vsel %vm435, %v387, 0
        %v440 = vsel %vm435, %v388, 0
        %v443 = vsel %vm435, %v389, 0
        %v446 = vsel %vm435, %v390, 0
        %v449 = vsel %vm435, %v391, 0
        %v452 = vsel %vm435, %v392, 0
        %v455 = vsel %vm435, %v393, 0
        %v458 = vsel %vm435, %v394, 0
        %v461 = vsel %vm435, %v395, 0
        %v464 = vsel %vm435, %v396, 0
        %v467 = vsel %vm435, %v397, 0
        %v470 = vsel %vm435, %v398, 0
        %v473 = vsel %vm435, %v399, 0
        %v476 = vsel %vm435, %v400, 0
        %v479 = vsel %vm435, %v401, 0
        %v482 = vsel %vm435, %v402, 0
        %v485 = vsel %vm435, %v403, 0
        %v488 = vsel %vm435, %v404, 0
        %v491 = vsel %vm435, %v405, 0
        %v494 = vsel %vm435, %v406, 0
        %v497 = vsel %vm435, %v407, 0
        %v500 = vsel %vm435, %v408, 0
        %v503 = vsel %vm435, %v409, 0
        %v506 = vsel %vm435, %v410, 0
        %v509 = vsel %vm435, %v411, 0
        %v512 = vsel %vm435, %v412, 0
        %v515 = vsel %vm435, %v413, 0
        %v518 = vsel %vm435, %v414, 0
        %v521 = vsel %vm435, %v415, 0
        %v524 = vsel %vm435, %v416, 0
        %v527 = vsel %vm435, %v417, 0
        %v530 = vsel %vm435, %v418, 0
        %532 = vmatprep.subr.mxu0 %v420
        %533 = vmatpush1.msra.mxu0 %v419
        %534 = vmatprep.subr.mxu0 %v422
        %535 = vmatpush1.msra.mxu0 %v421
        %536 = vmatprep.subr.mxu0 %v424
        %537 = vmatpush1.msra.mxu0 %v423
        %538 = vmatprep.subr.mxu0 %v426
        %539 = vmatpush1.msra.mxu0 %v425
        %540 = vmatprep.subr.mxu0 %v428
        %541 = vmatpush1.msra.mxu0 %v427
        %542 = vmatprep.subr.mxu0 %v430
        %543 = vmatpush1.msra.mxu0 %v429
        %544 = vmatprep.subr.mxu0 %v432
        %545 = vmatpush1.msra.mxu0 %v431
        %546 = vmatprep.subr.mxu0 %v434
        %547 = vmatpush1.msra.mxu0 %v433
        %548 = vmatprep.subr.mxu0 0.0
        %549 = vmatpush1.msra.mxu0 0.0
        %550 = vmatprep.subr.mxu0 0.0
        %551 = vmatpush1.msra.mxu0 0.0
        %552 = vmatprep.subr.mxu0 0.0
        %553 = vmatpush1.msra.mxu0 0.0
        %554 = vmatprep.subr.mxu0 0.0
        %555 = vmatpush1.msra.mxu0 0.0
        %556 = vmatprep.subr.mxu0 0.0
        %557 = vmatpush1.msra.mxu0 0.0
        %558 = vmatprep.subr.mxu0 0.0
        %559 = vmatpush1.msra.mxu0 0.0
        %560 = vmatprep.subr.mxu0 0.0
        %561 = vmatpush1.msra.mxu0 0.0
        %562 = vmatprep.subr.mxu0 0.0
        %563 = vmatpush1.msra.mxu0 0.0
        %564 = vmatprep.subr.mxu0 0.0
        %565 = vmatpush1.msra.mxu0 0.0
        %566 = vmatprep.subr.mxu0 0.0
        %567 = vmatpush1.msra.mxu0 0.0
        %568 = vmatprep.subr.mxu0 0.0
        %569 = vmatpush1.msra.mxu0 0.0
        %570 = vmatprep.subr.mxu0 0.0
        %571 = vmatpush1.msra.mxu0 0.0
        %572 = vmatprep.subr.mxu0 0.0
        %573 = vmatpush1.msra.mxu0 0.0
        %574 = vmatprep.subr.mxu0 0.0
        %575 = vmatpush1.msra.mxu0 0.0
        %576 = vmatprep.subr.mxu0 0.0
        %577 = vmatpush1.msra.mxu0 0.0
        %578 = vmatprep.subr.mxu0 0.0
        %579 = vmatpush1.msra.mxu0 0.0
        %580 = vmatprep.subr.mxu0 0.0
        %581 = vmatpush1.msra.mxu0 0.0
        %582 = vmatprep.subr.mxu0 0.0
        %583 = vmatpush1.msra.mxu0 0.0
        %584 = vmatprep.subr.mxu0 0.0
        %585 = vmatpush1.msra.mxu0 0.0
        %586 = vmatprep.subr.mxu0 0.0
        %587 = vmatpush1.msra.mxu0 0.0
        %588 = vmatprep.subr.mxu0 0.0
        %589 = vmatpush1.msra.mxu0 0.0
        %590 = vmatprep.subr.mxu0 0.0
        %591 = vmatpush1.msra.mxu0 0.0
        %592 = vmatprep.subr.mxu0 0.0
        %593 = vmatpush1.msra.mxu0 0.0
        %594 = vmatprep.subr.mxu0 0.0
        %595 = vmatpush1.msra.mxu0 0.0
        %596 = vmatprep.mubr.f32.mxu0 0.0
        %597 = vmatmul.mubr.f32.gmra.mrb[0].mxu0 %v437
        %v598 = vpop.f32.mrb[0].mxu0
        %v599 = vadd.f32 0.0, %v598
        %v600 = vpop.f32.mrb[0].mxu0
        %v601 = vadd.f32 0.0, %v600
        %602 = vmatprep.mubr.f32.mxu0 0.0
        %603 = vmatmul.mubr.f32.gmra.mrb[0].mxu0 %v440
        %v604 = vpop.f32.mrb[0].mxu0
        %v605 = vadd.f32 0.0, %v604
        %v606 = vpop.f32.mrb[0].mxu0
        %v607 = vadd.f32 0.0, %v606
        %608 = vmatprep.mubr.f32.mxu0 0.0
        %609 = vmatmul.mubr.f32.gmra.mrb[0].mxu0 %v443
        %v610 = vpop.f32.mrb[0].mxu0
        %v611 = vadd.f32 0.0, %v610
        %v612 = vpop.f32.mrb[0].mxu0
        %v613 = vadd.f32 0.0, %v612
        %614 = vmatprep.mubr.f32.mxu0 0.0
        %615 = vmatmul.mubr.f32.gmra.mrb[0].mxu0 %v446
        %v616 = vpop.f32.mrb[0].mxu0
        %v617 = vadd.f32 0.0, %v616
        %v618 = vpop.f32.mrb[0].mxu0
        %v619 = vadd.f32 0.0, %v618
        %620 = vmatprep.mubr.f32.mxu0 0.0
        %621 = vmatmul.mubr.f32.gmra.mrb[0].mxu0 %v449
        %v622 = vpop.f32.mrb[0].mxu0
        %v623 = vadd.f32 0.0, %v622
        %v624 = vpop.f32.mrb[0].mxu0
        %v625 = vadd.f32 0.0, %v624
        %626 = vmatprep.mubr.f32.mxu0 0.0
        %627 = vmatmul.mubr.f32.gmra.mrb[0].mxu0 %v452
        %v628 = vpop.f32.mrb[0].mxu0
        %v629 = vadd.f32 0.0, %v628
        %v630 = vpop.f32.mrb[0].mxu0
        %v631 = vadd.f32 0.0, %v630
        %632 = vmatprep.mubr.f32.mxu0 0.0
        %633 = vmatmul.mubr.f32.gmra.mrb[0].mxu0 %v455
        %v634 = vpop.f32.mrb[0].mxu0
        %v635 = vadd.f32 0.0, %v634
        %v636 = vpop.f32.mrb[0].mxu0
        %v637 = vadd.f32 0.0, %v636
        %638 = vmatprep.mubr.f32.mxu0 0.0
        %639 = vmatmul.mubr.f32.gmra.mrb[0].mxu0 %v458
        %v640 = vpop.f32.mrb[0].mxu0
        %v641 = vadd.f32 0.0, %v640
        %v642 = vpop.f32.mrb[0].mxu0
        %v643 = vadd.f32 0.0, %v642
        %644 = vmatprep.mubr.f32.mxu0 0.0
        %645 = vmatmul.mubr.f32.gmra.mrb[0].mxu0 %v461
        %v646 = vpop.f32.mrb[0].mxu0
        %v647 = vadd.f32 0.0, %v646
        %v648 = vpop.f32.mrb[0].mxu0
        %v649 = vadd.f32 0.0, %v648
        %650 = vmatprep.mubr.f32.mxu0 0.0
        %651 = vmatmul.mubr.f32.gmra.mrb[0].mxu0 %v464
        %v652 = vpop.f32.mrb[0].mxu0
        %v653 = vadd.f32 0.0, %v652
        %v654 = vpop.f32.mrb[0].mxu0
        %v655 = vadd.f32 0.0, %v654
        %656 = vmatprep.mubr.f32.mxu0 0.0
        %657 = vmatmul.mubr.f32.gmra.mrb[0].mxu0 %v467
        %v658 = vpop.f32.mrb[0].mxu0
        %v659 = vadd.f32 0.0, %v658
        %v660 = vpop.f32.mrb[0].mxu0
        %v661 = vadd.f32 0.0, %v660
        %662 = vmatprep.mubr.f32.mxu0 0.0
        %663 = vmatmul.mubr.f32.gmra.mrb[0].mxu0 %v470
        %v664 = vpop.f32.mrb[0].mxu0
        %v665 = vadd.f32 0.0, %v664
        %v666 = vpop.f32.mrb[0].mxu0
        %v667 = vadd.f32 0.0, %v666
        %668 = vmatprep.mubr.f32.mxu0 0.0
        %669 = vmatmul.mubr.f32.gmra.mrb[0].mxu0 %v473
        %v670 = vpop.f32.mrb[0].mxu0
        %v671 = vadd.f32 0.0, %v670
        %v672 = vpop.f32.mrb[0].mxu0
        %v673 = vadd.f32 0.0, %v672
        %674 = vmatprep.mubr.f32.mxu0 0.0
        %675 = vmatmul.mubr.f32.gmra.mrb[0].mxu0 %v476
        %v676 = vpop.f32.mrb[0].mxu0
        %v677 = vadd.f32 0.0, %v676
        %v678 = vpop.f32.mrb[0].mxu0
        %v679 = vadd.f32 0.0, %v678
        %680 = vmatprep.mubr.f32.mxu0 0.0
        %681 = vmatmul.mubr.f32.gmra.mrb[0].mxu0 %v479
        %v682 = vpop.f32.mrb[0].mxu0
        %v683 = vadd.f32 0.0, %v682
        %v684 = vpop.f32.mrb[0].mxu0
        %v685 = vadd.f32 0.0, %v684
        %686 = vmatprep.mubr.f32.mxu0 0.0
        %687 = vmatmul.mubr.f32.gmra.mrb[0].mxu0 %v482
        %v688 = vpop.f32.mrb[0].mxu0
        %v689 = vadd.f32 0.0, %v688
        %v690 = vpop.f32.mrb[0].mxu0
        %v691 = vadd.f32 0.0, %v690
        %692 = vmatprep.mubr.f32.mxu0 0.0
        %693 = vmatmul.mubr.f32.gmra.mrb[0].mxu0 %v485
        %v694 = vpop.f32.mrb[0].mxu0
        %v695 = vadd.f32 0.0, %v694
        %v696 = vpop.f32.mrb[0].mxu0
        %v697 = vadd.f32 0.0, %v696
        %698 = vmatprep.mubr.f32.mxu0 0.0
        %699 = vmatmul.mubr.f32.gmra.mrb[0].mxu0 %v488
        %v700 = vpop.f32.mrb[0].mxu0
        %v701 = vadd.f32 0.0, %v700
        %v702 = vpop.f32.mrb[0].mxu0
        %v703 = vadd.f32 0.0, %v702
        %704 = vmatprep.mubr.f32.mxu0 0.0
        %705 = vmatmul.mubr.f32.gmra.mrb[0].mxu0 %v491
        %v706 = vpop.f32.mrb[0].mxu0
        %v707 = vadd.f32 0.0, %v706
        %v708 = vpop.f32.mrb[0].mxu0
        %v709 = vadd.f32 0.0, %v708
        %710 = vmatprep.mubr.f32.mxu0 0.0
        %711 = vmatmul.mubr.f32.gmra.mrb[0].mxu0 %v494
        %v712 = vpop.f32.mrb[0].mxu0
        %v713 = vadd.f32 0.0, %v712
        %v714 = vpop.f32.mrb[0].mxu0
        %v715 = vadd.f32 0.0, %v714
        %716 = vmatprep.mubr.f32.mxu0 0.0
        %717 = vmatmul.mubr.f32.gmra.mrb[0].mxu0 %v497
        %v718 = vpop.f32.mrb[0].mxu0
        %v719 = vadd.f32 0.0, %v718
        %v720 = vpop.f32.mrb[0].mxu0
        %v721 = vadd.f32 0.0, %v720
        %722 = vmatprep.mubr.f32.mxu0 0.0
        %723 = vmatmul.mubr.f32.gmra.mrb[0].mxu0 %v500
        %v724 = vpop.f32.mrb[0].mxu0
        %v725 = vadd.f32 0.0, %v724
        %v726 = vpop.f32.mrb[0].mxu0
        %v727 = vadd.f32 0.0, %v726
        %728 = vmatprep.mubr.f32.mxu0 0.0
        %729 = vmatmul.mubr.f32.gmra.mrb[0].mxu0 %v503
        %v730 = vpop.f32.mrb[0].mxu0
        %v731 = vadd.f32 0.0, %v730
        %v732 = vpop.f32.mrb[0].mxu0
        %v733 = vadd.f32 0.0, %v732
        %734 = vmatprep.mubr.f32.mxu0 0.0
        %735 = vmatmul.mubr.f32.gmra.mrb[0].mxu0 %v506
        %v736 = vpop.f32.mrb[0].mxu0
        %v737 = vadd.f32 0.0, %v736
        %v738 = vpop.f32.mrb[0].mxu0
        %v739 = vadd.f32 0.0, %v738
        %740 = vmatprep.mubr.f32.mxu0 0.0
        %741 = vmatmul.mubr.f32.gmra.mrb[0].mxu0 %v509
        %v742 = vpop.f32.mrb[0].mxu0
        %v743 = vadd.f32 0.0, %v742
        %v744 = vpop.f32.mrb[0].mxu0
        %v745 = vadd.f32 0.0, %v744
        %746 = vmatprep.mubr.f32.mxu0 0.0
        %747 = vmatmul.mubr.f32.gmra.mrb[0].mxu0 %v512
        %v748 = vpop.f32.mrb[0].mxu0
        %v749 = vadd.f32 0.0, %v748
        %v750 = vpop.f32.mrb[0].mxu0
        %v751 = vadd.f32 0.0, %v750
        %752 = vmatprep.mubr.f32.mxu0 0.0
        %753 = vmatmul.mubr.f32.gmra.mrb[0].mxu0 %v515
        %v754 = vpop.f32.mrb[0].mxu0
        %v755 = vadd.f32 0.0, %v754
        %v756 = vpop.f32.mrb[0].mxu0
        %v757 = vadd.f32 0.0, %v756
        %758 = vmatprep.mubr.f32.mxu0 0.0
        %759 = vmatmul.mubr.f32.gmra.mrb[0].mxu0 %v518
        %v760 = vpop.f32.mrb[0].mxu0
        %v761 = vadd.f32 0.0, %v760
        %v762 = vpop.f32.mrb[0].mxu0
        %v763 = vadd.f32 0.0, %v762
        %764 = vmatprep.mubr.f32.mxu0 0.0
        %765 = vmatmul.mubr.f32.gmra.mrb[0].mxu0 %v521
        %v766 = vpop.f32.mrb[0].mxu0
        %v767 = vadd.f32 0.0, %v766
        %v768 = vpop.f32.mrb[0].mxu0
        %v769 = vadd.f32 0.0, %v768
        %770 = vmatprep.mubr.f32.mxu0 0.0
        %771 = vmatmul.mubr.f32.gmra.mrb[0].mxu0 %v524
        %v772 = vpop.f32.mrb[0].mxu0
        %v773 = vadd.f32 0.0, %v772
        %v774 = vpop.f32.mrb[0].mxu0
        %v775 = vadd.f32 0.0, %v774
        %776 = vmatprep.mubr.f32.mxu0 0.0
        %777 = vmatmul.mubr.f32.gmra.mrb[0].mxu0 %v527
        %v778 = vpop.f32.mrb[0].mxu0
        %v779 = vadd.f32 0.0, %v778
        %v780 = vpop.f32.mrb[0].mxu0
        %v781 = vadd.f32 0.0, %v780
        %782 = vmatprep.mubr.f32.mxu0 0.0
        %783 = vmatmul.mubr.f32.gmra.mrb[0].mxu0 %v530
        %v784 = vpop.f32.mrb[0].mxu0
        %v785 = vadd.f32 0.0, %v784
        %v786 = vpop.f32.mrb[0].mxu0
        %v787 = vadd.f32 0.0, %v786
        %788 = vdwg.mxu0
        %v789 = vadd.f32 %v323, %v599
        %v790 = vadd.f32 %v324, %v601
        %v791 = vadd.f32 %v325, %v605
        %v792 = vadd.f32 %v326, %v607
        %v793 = vadd.f32 %v327, %v611
        %v794 = vadd.f32 %v328, %v613
        %v795 = vadd.f32 %v329, %v617
        %v796 = vadd.f32 %v330, %v619
        %v797 = vadd.f32 %v331, %v623
        %v798 = vadd.f32 %v332, %v625
        %v799 = vadd.f32 %v333, %v629
        %v800 = vadd.f32 %v334, %v631
        %v801 = vadd.f32 %v335, %v635
        %v802 = vadd.f32 %v336, %v637
        %v803 = vadd.f32 %v337, %v641
        %v804 = vadd.f32 %v338, %v643
        %v805 = vadd.f32 %v339, %v647
        %v806 = vadd.f32 %v340, %v649
        %v807 = vadd.f32 %v341, %v653
        %v808 = vadd.f32 %v342, %v655
        %v809 = vadd.f32 %v343, %v659
        %v810 = vadd.f32 %v344, %v661
        %v811 = vadd.f32 %v345, %v665
        %v812 = vadd.f32 %v346, %v667
        %v813 = vadd.f32 %v347, %v671
        %v814 = vadd.f32 %v348, %v673
        %v815 = vadd.f32 %v349, %v677
        %v816 = vadd.f32 %v350, %v679
        %v817 = vadd.f32 %v351, %v683
        %v818 = vadd.f32 %v352, %v685
        %v819 = vadd.f32 %v353, %v689
        %v820 = vadd.f32 %v354, %v691
        %v821 = vadd.f32 %v355, %v695
        %v822 = vadd.f32 %v356, %v697
        %v823 = vadd.f32 %v357, %v701
        %v824 = vadd.f32 %v358, %v703
        %v825 = vadd.f32 %v359, %v707
        %v826 = vadd.f32 %v360, %v709
        %v827 = vadd.f32 %v361, %v713
        %v828 = vadd.f32 %v362, %v715
        %v829 = vadd.f32 %v363, %v719
        %v830 = vadd.f32 %v364, %v721
        %v831 = vadd.f32 %v365, %v725
        %v832 = vadd.f32 %v366, %v727
        %v833 = vadd.f32 %v367, %v731
        %v834 = vadd.f32 %v368, %v733
        %v835 = vadd.f32 %v369, %v737
        %v836 = vadd.f32 %v370, %v739
        %v837 = vadd.f32 %v371, %v743
        %v838 = vadd.f32 %v372, %v745
        %v839 = vadd.f32 %v373, %v749
        %v840 = vadd.f32 %v374, %v751
        %v841 = vadd.f32 %v375, %v755
        %v842 = vadd.f32 %v376, %v757
        %v843 = vadd.f32 %v377, %v761
        %v844 = vadd.f32 %v378, %v763
        %v845 = vadd.f32 %v379, %v767
        %v846 = vadd.f32 %v380, %v769
        %v847 = vadd.f32 %v381, %v773
        %v848 = vadd.f32 %v382, %v775
        %v849 = vadd.f32 %v383, %v779
        %v850 = vadd.f32 %v384, %v781
        %v851 = vadd.f32 %v385, %v785
        %v852 = vadd.f32 %v386, %v787
        %853 = vst [vmem:[#allocation2] sm:$0xff] %v789
        %854 = vst [vmem:[#allocation2 + $0x8] sm:$0xff] %v790
        %855 = vst [vmem:[#allocation2 + $0x10] sm:$0xff] %v791
        %856 = vst [vmem:[#allocation2 + $0x18] sm:$0xff] %v792
        %857 = vst [vmem:[#allocation2 + $0x20] sm:$0xff] %v793
        %858 = vst [vmem:[#allocation2 + $0x28] sm:$0xff] %v794
        %859 = vst [vmem:[#allocation2 + $0x30] sm:$0xff] %v795
        %860 = vst [vmem:[#allocation2 + $0x38] sm:$0xff] %v796
        %861 = vst [vmem:[#allocation2 + $0x40] sm:$0xff] %v797
        %862 = vst [vmem:[#allocation2 + $0x48] sm:$0xff] %v798
        %863 = vst [vmem:[#allocation2 + $0x50] sm:$0xff] %v799
        %864 = vst [vmem:[#allocation2 + $0x58] sm:$0xff] %v800
        %865 = vst [vmem:[#allocation2 + $0x60] sm:$0xff] %v801
        %866 = vst [vmem:[#allocation2 + $0x68] sm:$0xff] %v802
        %867 = vst [vmem:[#allocation2 + $0x70] sm:$0xff] %v803
        %868 = vst [vmem:[#allocation2 + $0x78] sm:$0xff] %v804
        %869 = vst [vmem:[#allocation2 + $0x80] sm:$0xff] %v805
        %870 = vst [vmem:[#allocation2 + $0x88] sm:$0xff] %v806
        %871 = vst [vmem:[#allocation2 + $0x90] sm:$0xff] %v807
        %872 = vst [vmem:[#allocation2 + $0x98] sm:$0xff] %v808
        %873 = vst [vmem:[#allocation2 + $0xa0] sm:$0xff] %v809
        %874 = vst [vmem:[#allocation2 + $0xa8] sm:$0xff] %v810
        %875 = vst [vmem:[#allocation2 + $0xb0] sm:$0xff] %v811
        %876 = vst [vmem:[#allocation2 + $0xb8] sm:$0xff] %v812
        %877 = vst [vmem:[#allocation2 + $0xc0] sm:$0xff] %v813
        %878 = vst [vmem:[#allocation2 + $0xc8] sm:$0xff] %v814
        %879 = vst [vmem:[#allocation2 + $0xd0] sm:$0xff] %v815
        %880 = vst [vmem:[#allocation2 + $0xd8] sm:$0xff] %v816
        %881 = vst [vmem:[#allocation2 + $0xe0] sm:$0xff] %v817
        %882 = vst [vmem:[#allocation2 + $0xe8] sm:$0xff] %v818
        %883 = vst [vmem:[#allocation2 + $0xf0] sm:$0xff] %v819
        %884 = vst [vmem:[#allocation2 + $0xf8] sm:$0xff] %v820
        %885 = vst [vmem:[#allocation2 + $0x100] sm:$0xff] %v821
        %886 = vst [vmem:[#allocation2 + $0x108] sm:$0xff] %v822
        %887 = vst [vmem:[#allocation2 + $0x110] sm:$0xff] %v823
        %888 = vst [vmem:[#allocation2 + $0x118] sm:$0xff] %v824
        %889 = vst [vmem:[#allocation2 + $0x120] sm:$0xff] %v825
        %890 = vst [vmem:[#allocation2 + $0x128] sm:$0xff] %v826
        %891 = vst [vmem:[#allocation2 + $0x130] sm:$0xff] %v827
        %892 = vst [vmem:[#allocation2 + $0x138] sm:$0xff] %v828
        %893 = vst [vmem:[#allocation2 + $0x140] sm:$0xff] %v829
        %894 = vst [vmem:[#allocation2 + $0x148] sm:$0xff] %v830
        %895 = vst [vmem:[#allocation2 + $0x150] sm:$0xff] %v831
        %896 = vst [vmem:[#allocation2 + $0x158] sm:$0xff] %v832
        %897 = vst [vmem:[#allocation2 + $0x160] sm:$0xff] %v833
        %898 = vst [vmem:[#allocation2 + $0x168] sm:$0xff] %v834
        %899 = vst [vmem:[#allocation2 + $0x170] sm:$0xff] %v835
        %900 = vst [vmem:[#allocation2 + $0x178] sm:$0xff] %v836
        %901 = vst [vmem:[#allocation2 + $0x180] sm:$0xff] %v837
        %902 = vst [vmem:[#allocation2 + $0x188] sm:$0xff] %v838
        %903 = vst [vmem:[#allocation2 + $0x190] sm:$0xff] %v839
        %904 = vst [vmem:[#allocation2 + $0x198] sm:$0xff] %v840
        %905 = vst [vmem:[#allocation2 + $0x1a0] sm:$0xff] %v841
        %906 = vst [vmem:[#allocation2 + $0x1a8] sm:$0xff] %v842
        %907 = vst [vmem:[#allocation2 + $0x1b0] sm:$0xff] %v843
        %908 = vst [vmem:[#allocation2 + $0x1b8] sm:$0xff] %v844
        %909 = vst [vmem:[#allocation2 + $0x1c0] sm:$0xff] %v845
        %910 = vst [vmem:[#allocation2 + $0x1c8] sm:$0xff] %v846
        %911 = vst [vmem:[#allocation2 + $0x1d0] sm:$0xff] %v847
        %912 = vst [vmem:[#allocation2 + $0x1d8] sm:$0xff] %v848
        %913 = vst [vmem:[#allocation2 + $0x1e0] sm:$0xff] %v849
        %914 = vst [vmem:[#allocation2 + $0x1e8] sm:$0xff] %v850
        %915 = vst [vmem:[#allocation2 + $0x1f0] sm:$0xff] %v851
        %916 = vst [vmem:[#allocation2 + $0x1f8] sm:$0xff] %v852
        // Predicated region
        $region56: #{tpu_custom_call.1} parent=46 // pred_check
          %p917 = pneg %p255
        $region57: #{tpu_custom_call.1} parent=46 // pred_check_branch
          %919 = sbr.rel (%p917) target = $region59
        $region58: #{tpu_custom_call.1} parent=46 // pred_region
          %v920 = vld [vmem:[#allocation2] sm:$0xff]
          %v921 = vld [vmem:[#allocation2 + $0x8] sm:$0xff]
          %v922 = vld [vmem:[#allocation2 + $0x10] sm:$0xff]
          %v923 = vld [vmem:[#allocation2 + $0x18] sm:$0xff]
          %v924 = vld [vmem:[#allocation2 + $0x20] sm:$0xff]
          %v925 = vld [vmem:[#allocation2 + $0x28] sm:$0xff]
          %v926 = vld [vmem:[#allocation2 + $0x30] sm:$0xff]
          %v927 = vld [vmem:[#allocation2 + $0x38] sm:$0xff]
          %v928 = vld [vmem:[#allocation2 + $0x40] sm:$0xff]
          %v929 = vld [vmem:[#allocation2 + $0x48] sm:$0xff]
          %v930 = vld [vmem:[#allocation2 + $0x50] sm:$0xff]
          %v931 = vld [vmem:[#allocation2 + $0x58] sm:$0xff]
          %v932 = vld [vmem:[#allocation2 + $0x60] sm:$0xff]
          %v933 = vld [vmem:[#allocation2 + $0x68] sm:$0xff]
          %v934 = vld [vmem:[#allocation2 + $0x70] sm:$0xff]
          %v935 = vld [vmem:[#allocation2 + $0x78] sm:$0xff]
          %v936 = vld [vmem:[#allocation2 + $0x80] sm:$0xff]
          %v937 = vld [vmem:[#allocation2 + $0x88] sm:$0xff]
          %v938 = vld [vmem:[#allocation2 + $0x90] sm:$0xff]
          %v939 = vld [vmem:[#allocation2 + $0x98] sm:$0xff]
          %v940 = vld [vmem:[#allocation2 + $0xa0] sm:$0xff]
          %v941 = vld [vmem:[#allocation2 + $0xa8] sm:$0xff]
          %v942 = vld [vmem:[#allocation2 + $0xb0] sm:$0xff]
          %v943 = vld [vmem:[#allocation2 + $0xb8] sm:$0xff]
          %v944 = vld [vmem:[#allocation2 + $0xc0] sm:$0xff]
          %v945 = vld [vmem:[#allocation2 + $0xc8] sm:$0xff]
          %v946 = vld [vmem:[#allocation2 + $0xd0] sm:$0xff]
          %v947 = vld [vmem:[#allocation2 + $0xd8] sm:$0xff]
          %v948 = vld [vmem:[#allocation2 + $0xe0] sm:$0xff]
          %v949 = vld [vmem:[#allocation2 + $0xe8] sm:$0xff]
          %v950 = vld [vmem:[#allocation2 + $0xf0] sm:$0xff]
          %v951 = vld [vmem:[#allocation2 + $0xf8] sm:$0xff]
          %v952 = vld [vmem:[#allocation2 + $0x100] sm:$0xff]
          %v953 = vld [vmem:[#allocation2 + $0x108] sm:$0xff]
          %v954 = vld [vmem:[#allocation2 + $0x110] sm:$0xff]
          %v955 = vld [vmem:[#allocation2 + $0x118] sm:$0xff]
          %v956 = vld [vmem:[#allocation2 + $0x120] sm:$0xff]
          %v957 = vld [vmem:[#allocation2 + $0x128] sm:$0xff]
          %v958 = vld [vmem:[#allocation2 + $0x130] sm:$0xff]
          %v959 = vld [vmem:[#allocation2 + $0x138] sm:$0xff]
          %v960 = vld [vmem:[#allocation2 + $0x140] sm:$0xff]
          %v961 = vld [vmem:[#allocation2 + $0x148] sm:$0xff]
          %v962 = vld [vmem:[#allocation2 + $0x150] sm:$0xff]
          %v963 = vld [vmem:[#allocation2 + $0x158] sm:$0xff]
          %v964 = vld [vmem:[#allocation2 + $0x160] sm:$0xff]
          %v965 = vld [vmem:[#allocation2 + $0x168] sm:$0xff]
          %v966 = vld [vmem:[#allocation2 + $0x170] sm:$0xff]
          %v967 = vld [vmem:[#allocation2 + $0x178] sm:$0xff]
          %v968 = vld [vmem:[#allocation2 + $0x180] sm:$0xff]
          %v969 = vld [vmem:[#allocation2 + $0x188] sm:$0xff]
          %v970 = vld [vmem:[#allocation2 + $0x190] sm:$0xff]
          %v971 = vld [vmem:[#allocation2 + $0x198] sm:$0xff]
          %v972 = vld [vmem:[#allocation2 + $0x1a0] sm:$0xff]
          %v973 = vld [vmem:[#allocation2 + $0x1a8] sm:$0xff]
          %v974 = vld [vmem:[#allocation2 + $0x1b0] sm:$0xff]
          %v975 = vld [vmem:[#allocation2 + $0x1b8] sm:$0xff]
          %v976 = vld [vmem:[#allocation2 + $0x1c0] sm:$0xff]
          %v977 = vld [vmem:[#allocation2 + $0x1c8] sm:$0xff]
          %v978 = vld [vmem:[#allocation2 + $0x1d0] sm:$0xff]
          %v979 = vld [vmem:[#allocation2 + $0x1d8] sm:$0xff]
          %v980 = vld [vmem:[#allocation2 + $0x1e0] sm:$0xff]
          %v981 = vld [vmem:[#allocation2 + $0x1e8] sm:$0xff]
          %v982 = vld [vmem:[#allocation2 + $0x1f0] sm:$0xff]
          %v983 = vld [vmem:[#allocation2 + $0x1f8] sm:$0xff]
          %984 = vst [vmem:[%s241] sm:$0xff] %v920
          %985 = vst [vmem:[%s241 + $0x8] sm:$0xff] %v921
          %986 = vst [vmem:[%s241 + $0x10] sm:$0xff] %v922
          %987 = vst [vmem:[%s241 + $0x18] sm:$0xff] %v923
          %988 = vst [vmem:[%s241 + $0x20] sm:$0xff] %v924
          %989 = vst [vmem:[%s241 + $0x28] sm:$0xff] %v925
          %990 = vst [vmem:[%s241 + $0x30] sm:$0xff] %v926
          %991 = vst [vmem:[%s241 + $0x38] sm:$0xff] %v927
          %992 = vst [vmem:[%s241 + $0x40] sm:$0xff] %v928
          %993 = vst [vmem:[%s241 + $0x48] sm:$0xff] %v929
          %994 = vst [vmem:[%s241 + $0x50] sm:$0xff] %v930
          %995 = vst [vmem:[%s241 + $0x58] sm:$0xff] %v931
          %996 = vst [vmem:[%s241 + $0x60] sm:$0xff] %v932
          %997 = vst [vmem:[%s241 + $0x68] sm:$0xff] %v933
          %998 = vst [vmem:[%s241 + $0x70] sm:$0xff] %v934
          %999 = vst [vmem:[%s241 + $0x78] sm:$0xff] %v935
          %1000 = vst [vmem:[%s241 + $0x80] sm:$0xff] %v936
          %1001 = vst [vmem:[%s241 + $0x88] sm:$0xff] %v937
          %1002 = vst [vmem:[%s241 + $0x90] sm:$0xff] %v938
          %1003 = vst [vmem:[%s241 + $0x98] sm:$0xff] %v939
          %1004 = vst [vmem:[%s241 + $0xa0] sm:$0xff] %v940
          %1005 = vst [vmem:[%s241 + $0xa8] sm:$0xff] %v941
          %1006 = vst [vmem:[%s241 + $0xb0] sm:$0xff] %v942
          %1007 = vst [vmem:[%s241 + $0xb8] sm:$0xff] %v943
          %1008 = vst [vmem:[%s241 + $0xc0] sm:$0xff] %v944
          %1009 = vst [vmem:[%s241 + $0xc8] sm:$0xff] %v945
          %1010 = vst [vmem:[%s241 + $0xd0] sm:$0xff] %v946
          %1011 = vst [vmem:[%s241 + $0xd8] sm:$0xff] %v947
          %1012 = vst [vmem:[%s241 + $0xe0] sm:$0xff] %v948
          %1013 = vst [vmem:[%s241 + $0xe8] sm:$0xff] %v949
          %1014 = vst [vmem:[%s241 + $0xf0] sm:$0xff] %v950
          %1015 = vst [vmem:[%s241 + $0xf8] sm:$0xff] %v951
          %1016 = vst [vmem:[%s241 + $0x100] sm:$0xff] %v952
          %1017 = vst [vmem:[%s241 + $0x108] sm:$0xff] %v953
          %1018 = vst [vmem:[%s241 + $0x110] sm:$0xff] %v954
          %1019 = vst [vmem:[%s241 + $0x118] sm:$0xff] %v955
          %1020 = vst [vmem:[%s241 + $0x120] sm:$0xff] %v956
          %1021 = vst [vmem:[%s241 + $0x128] sm:$0xff] %v957
          %1022 = vst [vmem:[%s241 + $0x130] sm:$0xff] %v958
          %1023 = vst [vmem:[%s241 + $0x138] sm:$0xff] %v959
          %1024 = vst [vmem:[%s241 + $0x140] sm:$0xff] %v960
          %1025 = vst [vmem:[%s241 + $0x148] sm:$0xff] %v961
          %1026 = vst [vmem:[%s241 + $0x150] sm:$0xff] %v962
          %1027 = vst [vmem:[%s241 + $0x158] sm:$0xff] %v963
          %1028 = vst [vmem:[%s241 + $0x160] sm:$0xff] %v964
          %1029 = vst [vmem:[%s241 + $0x168] sm:$0xff] %v965
          %1030 = vst [vmem:[%s241 + $0x170] sm:$0xff] %v966
          %1031 = vst [vmem:[%s241 + $0x178] sm:$0xff] %v967
          %1032 = vst [vmem:[%s241 + $0x180] sm:$0xff] %v968
          %1033 = vst [vmem:[%s241 + $0x188] sm:$0xff] %v969
          %1034 = vst [vmem:[%s241 + $0x190] sm:$0xff] %v970
          %1035 = vst [vmem:[%s241 + $0x198] sm:$0xff] %v971
          %1036 = vst [vmem:[%s241 + $0x1a0] sm:$0xff] %v972
          %1037 = vst [vmem:[%s241 + $0x1a8] sm:$0xff] %v973
          %1038 = vst [vmem:[%s241 + $0x1b0] sm:$0xff] %v974
          %1039 = vst [vmem:[%s241 + $0x1b8] sm:$0xff] %v975
          %1040 = vst [vmem:[%s241 + $0x1c0] sm:$0xff] %v976
          %1041 = vst [vmem:[%s241 + $0x1c8] sm:$0xff] %v977
          %1042 = vst [vmem:[%s241 + $0x1d0] sm:$0xff] %v978
          %1043 = vst [vmem:[%s241 + $0x1d8] sm:$0xff] %v979
          %1044 = vst [vmem:[%s241 + $0x1e0] sm:$0xff] %v980
          %1045 = vst [vmem:[%s241 + $0x1e8] sm:$0xff] %v981
          %1046 = vst [vmem:[%s241 + $0x1f0] sm:$0xff] %v982
          %1047 = vst [vmem:[%s241 + $0x1f8] sm:$0xff] %v983
        $region59: #{tpu_custom_call.1} parent=46 // pred_fallthru
          _
        %s1048 = sand.u32 %s101, 1
        %s1049 = scalar_lea.sflag [#allocation5], %s1048
        %s1050 = sand.u32 %s101, 1
        %s1051 = smul.addr %s1050, 512
        %s1052 = scalar_lea.vmem [#allocation4], %s1051
        // Predicated region
        $region60: #{tpu_custom_call.1} parent=46 // pred_check
          %p1053 = pneg %p111
        $region61: #{tpu_custom_call.1} parent=46 // pred_check_branch
          %1055 = sbr.rel (%p1053) target = $region63
        $region62: #{tpu_custom_call.1} parent=46 // pred_region
          %s1056 = smul.u32 32, %s21
          %s1057 = smul.u32 2, %s22
          %s1059 = ssub.s32 8192, 8192
          %1060 = vsyncadd %s1049, %s1059
          %s1061 = smul.addr %s1056, 6
          %s1062 = sadd.s32 %s1057, %s1061
          %s1063 = smul.addr %s1062, 128
          %s1064 = scalar_lea.hbm %s2, %s1063
          %s1065 = sshll.u32 %s1052, 4
          %s1066 = int_to_ptr.vmem [resolvable:$true] %s1065
          %1071 = dma.vmem_to_hbm [thread:$0]  %s1066, 8192, %s1064, %s1049, 256, 768, 16
        $region63: #{tpu_custom_call.1} parent=46 // pred_fallthru
          _
      $region47: #{tpu_custom_call.1} parent=5 // pred_fallthru
        _
      %p1072 = scmp.le.s32.totalorder 2, %s11
      // Predicated region
      $region64: #{tpu_custom_call.1} parent=5 // pred_check
        %p1073 = pneg %p1072
      $region65: #{tpu_custom_call.1} parent=5 // pred_check_branch
        %1075 = sbr.rel (%p1073) target = $region67
      $region66: #{tpu_custom_call.1} parent=5 // pred_region
        %s1076 = ssub.s32 %s11, 2
        // Predicated region
        $region68: #{tpu_custom_call.1} parent=66 // pred_check
          %p1077 = pneg %p117
        $region69: #{tpu_custom_call.1} parent=66 // pred_check_branch
          %1079 = sbr.rel (%p1077) target = $region71
        $region70: #{tpu_custom_call.1} parent=66 // pred_region
          %s1080 = sand.u32 %s102, 1
          %s1081 = scalar_lea.sflag [#allocation5], %s1080
          %s1082 = sand.u32 %s102, 1
          %s1083 = smul.addr %s1082, 512
          %s1084 = scalar_lea.vmem [#allocation4], %s1083
          %1085 = dma.done %s1081, 8192
        $region71: #{tpu_custom_call.1} parent=66 // pred_fallthru
          _
      $region67: #{tpu_custom_call.1} parent=5 // pred_fallthru
        _
    $region6: #{tpu_custom_call.1} parent=1 // loop_footer
      %s15 = sadd.s32 1, %s11
    $region7: #{tpu_custom_call.1} parent=1 // loop_footer_branch
      %10 = sbr.rel target = $region3
    $region8: #{tpu_custom_call.1} parent=1 // loop_exit
      _
    %1086 = vsyncpa [#allocation5], 1
    %s1087 = scalar_lea.sflag [#allocation5], 1
    %1088 = vsyncpa %s1087, 1

</llo_original>
